<compile_context>
chip_gen: v7x
topology: tpu7x:2x2x1
jax: 0.10.0
libtpu: 0.0.40
codegen_flags: <defaults>
</compile_context>

<pallas_src>
import math

import jax
import jax.numpy as jnp
import numpy as np
from jax import lax
from jax.experimental import pallas as pl
from jax.experimental.pallas import tpu as pltpu


def _round_up(n, m):
    return -(-n // m) * m


# ----------------------------------------------------------------------------
# Single fused Pallas kernel
# ----------------------------------------------------------------------------
def _make_fused_kernel(*, B, T, in_ch, inner, cond, K, dils, tail_rows):
    L = B * T            # lane width of the main path (batch folded into lanes)
    K_IN = 3             # conv_in kernel size (fixed by the module)
    two_inner = 2 * inner
    pad_k = (K - 1) // 2
    sqrt_half = math.sqrt(0.5)
    tail_pad = tail_rows - cond - 1

    def kernel(c_ref, x_ref, wcin_ref, ucat_ref, wfirst_ref, bfirst_ref,
               wconv_ref, wos_ref, w1_ref, w2_ref, o_ref):
        f32 = jnp.float32
        bf16 = jnp.bfloat16

        # ---- conditioning front-end: conv_in(k=3) + nearest-up + FIR --------
        # Two matmuls: (cond,Lc)x(Lc,3L) time transform (all upsample stages &
        # conv_in zero-pad shifts folded into `ucat` at weight prep), then the
        # tap-hstacked conv_in channel mix.  Lane slices are 128-aligned.
        c0 = c_ref[...].astype(bf16)                              # (cond, Lc)
        y = jnp.dot(c0, ucat_ref[...], preferred_element_type=f32)  # (cond, 3L)
        y_stk = jnp.concatenate(
            [y[:, k * L:(k + 1) * L] for k in range(K_IN)], axis=0)  # (3c, L)
        cc = jnp.dot(wcin_ref[...], y_stk.astype(bf16),
                     preferred_element_type=f32)                  # (cond, L)

        # shared matmul "tail" = [cc ; ones ; zero-pad]  (tail_rows, L).
        # Appended to every matmul RHS so the cond projection and all biases
        # ride inside the main matmuls (weights carry matching columns; the
        # extra rows meet zero weight columns where they are not needed).
        pieces = [cc, jnp.ones((1, L), f32)]
        if tail_pad > 0:
            pieces.append(jnp.zeros((tail_pad, L), f32))
        tail = jnp.concatenate(pieces, axis=0)

        # ---- first_conv (1x1) ------------------------------------------------
        x0 = x_ref[...]                                           # (in_ch, L)
        if in_ch == 1:
            xx = wfirst_ref[...] * x0 + bfirst_ref[...]           # (inner, L)
        else:
            xx = (jnp.dot(wfirst_ref[...], x0, preferred_element_type=f32)
                  + bfirst_ref[...])

        # per-lane time index inside each batch segment + hoisted halo masks
        # (dilations repeat, so the distinct masks are computed once).
        t_idx = lax.broadcasted_iota(jnp.int32, (1, L), 1) % T
        offs = sorted({(k - pad_k) * d for k in range(K) for d in dils} - {0})
        masks = {o: jnp.logical_and(t_idx + o >= 0, t_idx + o < T)
                 for o in offs}

        # ---- WaveNet residual stack (unrolled; all VMEM/vreg-resident) ------
        skips = jnp.zeros((inner, L), f32)
        for li, dil in enumerate(dils):
            # im2col: stack the K dilated taps along sublanes.
            rows = []
            for k in range(K):
                off = (k - pad_k) * dil
                if off == 0:
                    rows.append(xx)
                else:
                    sh = pltpu.roll(xx, shift=(-off) % L, axis=1)
                    rows.append(jnp.where(masks[off], sh, 0.0))
            # ONE matmul: dilated conv + cond projection + bias (128-wide K).
            taps = jnp.concatenate(rows + [tail], axis=0).astype(bf16)
            wl = wconv_ref[pl.ds(li * two_inner, two_inner), :]
            z = jnp.dot(wl, taps, preferred_element_type=f32)     # (2C, L)
            gate = jnp.tanh(z[:inner, :]) * jax.nn.sigmoid(z[inner:, :])

            # merged out_layer (rows :C) + skip_layer (rows C:); skip rows are
            # pre-scaled by BN1-scale*sqrt(1/n_layers), biases in the ones col.
            ga = jnp.concatenate([gate, tail], axis=0).astype(bf16)
            wo = wos_ref[pl.ds(li * two_inner, two_inner), :]
            os_ = jnp.dot(wo, ga, preferred_element_type=f32)     # (2C, L)
            xx = (os_[:inner, :] + xx) * sqrt_half
            skips = skips + os_[inner:, :]

        # ---- head: (BN1 folded) ReLU -> 1x1(+BN2 folded) -> ReLU -> 1x1 ------
        h = jnp.maximum(skips, 0.0)
        ha = jnp.concatenate([h, tail], axis=0).astype(bf16)
        h1 = jnp.maximum(jnp.dot(w1_ref[...], ha,
                                 preferred_element_type=f32), 0.0)
        h1a = jnp.concatenate([h1, tail], axis=0).astype(bf16)
        o_ref[...] = jnp.dot(w2_ref[...], h1a, preferred_element_type=f32)

    return kernel


# ----------------------------------------------------------------------------
# Parameters (deterministic synthetic init, PyTorch weight shapes)
# ----------------------------------------------------------------------------
def init_params(key, cfg):
    inner, cond = cfg["inner"], cfg["cond"]
    in_ch, out_ch = cfg["in_ch"], cfg["out_ch"]
    K = cfg["kernel_size"]
    scales = cfg["upsample_scales"]
    nl = cfg["n_layers"]
    lps = nl // cfg["n_stacks"]
    keys = iter(jax.random.split(key, 128))

    def w(shape, scale=0.15):
        return jax.random.normal(next(keys), shape, jnp.float32) * scale

    p = {}
    p["conv_in_w"] = w((cond, cond, 3))                       # Conv1d, no bias
    p["ups_w"] = [w((1, 2 * s + 1), 0.25) for s in scales]    # Conv2d(1,1,(1,K))
    p["first_w"] = w((inner, in_ch, 1))
    p["first_b"] = w((inner,), 0.05)
    blocks = []
    for i in range(nl):
        dil = 2 ** (i % lps)
        blocks.append(dict(
            dil=dil,
            conv_w=w((2 * inner, inner, K)), conv_b=w((2 * inner,), 0.05),
            cond_w=w((2 * inner, cond, 1)), cond_b=w((2 * inner,), 0.05),
            out_w=w((inner, inner, 1)), out_b=w((inner,), 0.05),
            skip_w=w((inner, inner, 1)), skip_b=w((inner,), 0.05)))
    p["blocks"] = blocks
    p["bn1"] = (1.0 + w((inner,), 0.05), w((inner,), 0.05),
                w((inner,), 0.05), 1.0 + jnp.abs(w((inner,), 0.05)))
    p["head1_w"] = w((inner, inner, 1))
    p["head1_b"] = w((inner,), 0.05)
    p["bn2"] = (1.0 + w((inner,), 0.05), w((inner,), 0.05),
                w((inner,), 0.05), 1.0 + jnp.abs(w((inner,), 0.05)))
    p["head2_w"] = w((out_ch, inner, 1))
    p["head2_b"] = w((out_ch,), 0.05)
    return p


# ----------------------------------------------------------------------------
# Generator forward (single pallas_call)
# ----------------------------------------------------------------------------
def generator_forward(params, x, c, cfg):
    B, in_ch, T = x.shape
    cond = c.shape[1]
    Tc = c.shape[-1]
    inner = cfg["inner"]
    out_ch = cfg["out_ch"]
    K = cfg["kernel_size"]
    scales = list(cfg["upsample_scales"])
    nl = cfg["n_layers"]
    lps = nl // cfg["n_stacks"]
    dils = [2 ** (i % lps) for i in range(nl)]
    L, Lc = B * T, B * Tc
    two_inner = 2 * inner
    f32, bf16 = jnp.float32, jnp.bfloat16

    tail_rows = _round_up(cond + 1, 16)      # cc + ones + pad (alignment)
    tail_pad = tail_rows - cond - 1

    # --- cond-path time transforms (static structure, weight prep) -----------
    # conv_in zero-pad shifts (per batch block) ...
    S = np.zeros((3, Lc, Lc), np.float32)
    for k in range(3):
        off = k - 1
        for b in range(B):
            for t in range(Tc):
                src = t + off
                if 0 <= src < Tc:
                    S[k, b * Tc + src, b * Tc + t] = 1.0
    # ... folded with every (nearest-upsample + FIR) stage.
    U = jnp.asarray(S)                                          # (3, Lc, Lc)
    T_cur = Tc
    for s, fw in zip(scales, params["ups_w"]):
        Ks = 2 * s + 1
        T_next = T_cur * s
        A = np.zeros((Ks, T_cur, T_next), np.float32)
        for k in range(Ks):
            for t in range(T_next):
                j = t + k - s
                if 0 <= j < T_next:
                    A[k, j // s, t] = 1.0
        M = jnp.tensordot(fw[0], jnp.asarray(A), axes=1)        # (T_cur, T_next)
        M_bd = jnp.kron(jnp.eye(B, dtype=f32), M)               # block-diag per batch
        U = jnp.einsum("kab,bc->kac", U, M_bd)
        T_cur = T_next
    assert T_cur == T, "upsample scales inconsistent with x / c lengths"
    # TODO(synk): the dense (Lc, 3*L) matrix is O(Tc*T); switch to a banded
    #             roll-based upsample + FIR for real audio lengths.
    ucat = jnp.transpose(U, (1, 0, 2)).reshape(Lc, 3 * L).astype(bf16)

    # conv_in weight, tap-hstacked: (cond, 3*cond)
    wcin = (jnp.transpose(params["conv_in_w"], (0, 2, 1))
            .reshape(cond, 3 * cond).astype(bf16))

    # first conv (1x1)
    wfirst = params["first_w"][:, :, 0]                         # (inner, in_ch)
    bfirst = params["first_b"][:, None]                         # (inner, 1)

    # fold eval-BN (+ sqrt(1/n_layers) skip scale) into the weight slabs
    eps = 1e-5
    g1, bb1, m1, v1 = params["bn1"]
    s1 = g1 / jnp.sqrt(v1 + eps)
    t1 = bb1 - m1 * s1
    s1 = s1 * math.sqrt(1.0 / nl)
    g2, bb2, m2, v2 = params["bn2"]
    s2 = g2 / jnp.sqrt(v2 + eps)
    t2 = bb2 - m2 * s2

    def aug(wmat, bias_vec, cond_cols=None):
        # weight columns laid out to match the [act ; cc ; 1 ; 0-pad] RHS rows
        rows_n = wmat.shape[0]
        blocks = [wmat,
                  cond_cols if cond_cols is not None
                  else jnp.zeros((rows_n, cond), f32),
                  bias_vec[:, None]]
        if tail_pad > 0:
            blocks.append(jnp.zeros((rows_n, tail_pad), f32))
        return jnp.concatenate(blocks, axis=1)

    wconv_l, wos_l = [], []
    for li, blk in enumerate(params["blocks"]):
        # (2C, C, K) -> tap-major (2C, K*C) matching the tap-stacked im2col
        wtap = (jnp.transpose(blk["conv_w"], (0, 2, 1))
                .reshape(two_inner, K * inner))
        wconv_l.append(aug(wtap, blk["conv_b"] + blk["cond_b"],
                           cond_cols=blk["cond_w"][:, :, 0]))
        # merged out_layer + skip_layer; BN1 scale & sqrt(1/nl) folded into the
        # skip rows, BN1 shift folded once into layer 0's skip bias.
        w_skip = blk["skip_w"][:, :, 0] * s1[:, None]
        b_skip = blk["skip_b"] * s1 + (t1 if li == 0 else 0.0)
        wos_l.append(aug(jnp.concatenate([blk["out_w"][:, :, 0], w_skip], 0),
                         jnp.concatenate([blk["out_b"], b_skip], 0)))
    wconv_all = jnp.concatenate(wconv_l, axis=0).astype(bf16)   # (nl*2C, K*C+tail)
    wos_all = jnp.concatenate(wos_l, axis=0).astype(bf16)       # (nl*2C, C+tail)

    # head 1x1 convs with BN2 folded into the first one
    w1_aug = aug(params["head1_w"][:, :, 0] * s2[:, None],
                 params["head1_b"] * s2 + t2).astype(bf16)      # (C, C+tail)
    w2_aug = aug(params["head2_w"][:, :, 0],
                 params["head2_b"]).astype(bf16)                # (out, C+tail)

    # lane-dense layouts: (C, B*T)
    x_flat = jnp.transpose(x, (1, 0, 2)).reshape(in_ch, L)
    c_flat = jnp.transpose(c, (1, 0, 2)).reshape(cond, Lc)

    kernel = _make_fused_kernel(B=B, T=T, in_ch=in_ch, inner=inner, cond=cond,
                                K=K, dils=dils, tail_rows=tail_rows)
    out_flat = pl.pallas_call(
        kernel,
        out_shape=jax.ShapeDtypeStruct((out_ch, L), f32),
        # no grid: single invocation, every operand lives whole in VMEM
    )(c_flat, x_flat, wcin, ucat, wfirst, bfirst,
      wconv_all, wos_all, w1_aug, w2_aug)

    return jnp.transpose(out_flat.reshape(out_ch, B, T), (1, 0, 2))


# ----------------------------------------------------------------------------
# Pure-JAX reference (mirrors the PyTorch module, eval mode)
# ----------------------------------------------------------------------------
def ref_forward(params, x, c, cfg):
    def conv1d(h, w, b, dil=1, pad=0):
        out = jax.lax.conv_general_dilated(
            h, w, window_strides=(1,), padding=[(pad, pad)],
            rhs_dilation=(dil,), dimension_numbers=("NCH", "OIH", "NCH"),
            precision=jax.lax.Precision.HIGHEST)
        if b is not None:
            out = out + b[None, :, None]
        return out

    inner = cfg["inner"]
    K = cfg["kernel_size"]
    cc = conv1d(c, params["conv_in_w"], None, pad=1)
    for s, fw in zip(cfg["upsample_scales"], params["ups_w"]):
        cc = jnp.repeat(cc, s, axis=-1)
        B, Cc, Tt = cc.shape
        flat = cc.reshape(B * Cc, 1, Tt)
        flat = conv1d(flat, fw.reshape(1, 1, -1), None, pad=s)
        cc = flat.reshape(B, Cc, Tt)

    xx = conv1d(x, params["first_w"], params["first_b"])
    skips = 0.0
    for blk in params["blocks"]:
        pad = (K - 1) // 2 * blk["dil"]
        out = conv1d(xx, blk["conv_w"], blk["conv_b"], dil=blk["dil"], pad=pad)
        o1, o2 = out[:, :inner], out[:, inner:]
        cp = conv1d(cc, blk["cond_w"], blk["cond_b"])
        c1, c2 = cp[:, :inner], cp[:, inner:]
        gate = jnp.tanh(o1 + c1) * jax.nn.sigmoid(o2 + c2)
        skips = skips + conv1d(gate, blk["skip_w"], blk["skip_b"])
        xx = (conv1d(gate, blk["out_w"], blk["out_b"]) + xx) * math.sqrt(0.5)
    skips = skips * math.sqrt(1.0 / len(params["blocks"]))

    eps = 1e-5

    def bn(h, g, b, m, v):
        return ((h - m[None, :, None]) / jnp.sqrt(v[None, :, None] + eps)
                * g[None, :, None] + b[None, :, None])

    h = jnp.maximum(bn(skips, *params["bn1"]), 0.0)
    h = conv1d(h, params["head1_w"], params["head1_b"])
    h = jnp.maximum(bn(h, *params["bn2"]), 0.0)
    h = conv1d(h, params["head2_w"], params["head2_b"])
    return h


# ----------------------------------------------------------------------------
if __name__ == "__main__":
    cfg = dict(in_ch=1, out_ch=1, inner=32, cond=16,
               upsample_scales=[4, 2], n_layers=4, n_stacks=2,
               kernel_size=3)
    key = jax.random.PRNGKey(0)
    kp, kx, kc = jax.random.split(key, 3)
    params = init_params(kp, cfg)

    B, Tc = 2, 8
    T = Tc * int(np.prod(cfg["upsample_scales"]))             # 64
    x = jax.random.normal(kx, (B, cfg["in_ch"], T), jnp.float32)
    c = jax.random.normal(kc, (B, cfg["cond"], Tc), jnp.float32)

    fwd = jax.jit(lambda p, xv, cv: generator_forward(p, xv, cv, cfg))
    out = jax.block_until_ready(fwd(params, x, c))

    ref = jax.block_until_ready(ref_forward(params, x, c, cfg))

    out_np, ref_np = np.asarray(out), np.asarray(ref)
    assert out_np.shape == (B, cfg["out_ch"], T)
    rel_err = np.max(np.abs(out_np - ref_np)) / (np.max(np.abs(ref_np)) + 1e-8)
    # bf16 matmul operands (f32 accumulation) vs the f32 HIGHEST-precision
    # reference: the gap is operand-quantization noise (typically ~1e-2).
    assert rel_err < 4e-2, f"mismatch, rel_err={rel_err}"
    print("KERNEL_OK")
</pallas_src>

<mosaic_0001>
module attributes {stable_mosaic.version = 11 : i64} {
  func.func @kernel(%arg0: memref<16x16xf32, #tpu.memory_space<vmem>>, %arg1: memref<1x128xf32, #tpu.memory_space<vmem>>, %arg2: memref<16x48xbf16, #tpu.memory_space<vmem>>, %arg3: memref<16x384xbf16, #tpu.memory_space<vmem>>, %arg4: memref<32x1xf32, #tpu.memory_space<vmem>>, %arg5: memref<32x1xf32, #tpu.memory_space<vmem>>, %arg6: memref<256x128xbf16, #tpu.memory_space<vmem>>, %arg7: memref<256x64xbf16, #tpu.memory_space<vmem>>, %arg8: memref<32x64xbf16, #tpu.memory_space<vmem>>, %arg9: memref<1x64xbf16, #tpu.memory_space<vmem>>, %arg10: memref<1x128xf32, #tpu.memory_space<vmem>>) attributes {dimension_semantics = [], scalar_prefetch = 0 : i64, scratch_operands = 0 : i64, tpu.core_type = #tpu.core_type<tc>} {
    %c0 = arith.constant 0 : index
    %c0_0 = arith.constant 0 : index
    %0 = vector.load %arg0[%c0, %c0_0] : memref<16x16xf32, #tpu.memory_space<vmem>>, vector<16x16xf32>
    %1 = arith.truncf %0 : vector<16x16xf32> to vector<16x16xbf16>
    %c0_1 = arith.constant 0 : index
    %c0_2 = arith.constant 0 : index
    %2 = vector.load %arg3[%c0_1, %c0_2] : memref<16x384xbf16, #tpu.memory_space<vmem>>, vector<16x384xbf16>
    %cst = arith.constant dense<0.000000e+00> : vector<16x384xf32>
    %3 = tpu.matmul %1, %2, %cst {dimension_numbers = #tpu.dot_dimension_numbers<[1], [0], [0], [1], [0, 0, 1, 1], [], []>} : vector<16x16xbf16>, vector<16x384xbf16>, vector<16x384xf32> -> vector<16x384xf32>
    %4 = vector.extract_strided_slice %3 {offsets = [0, 0], sizes = [16, 128], strides = [1, 1]} : vector<16x384xf32> to vector<16x128xf32>
    %5 = vector.extract_strided_slice %3 {offsets = [0, 128], sizes = [16, 128], strides = [1, 1]} : vector<16x384xf32> to vector<16x128xf32>
    %6 = vector.extract_strided_slice %3 {offsets = [0, 256], sizes = [16, 128], strides = [1, 1]} : vector<16x384xf32> to vector<16x128xf32>
    %7 = tpu.concatenate %4, %5, %6 in 0 : vector<16x128xf32>, vector<16x128xf32>, vector<16x128xf32> -> vector<48x128xf32>
    %c0_3 = arith.constant 0 : index
    %c0_4 = arith.constant 0 : index
    %8 = vector.load %arg2[%c0_3, %c0_4] : memref<16x48xbf16, #tpu.memory_space<vmem>>, vector<16x48xbf16>
    %9 = arith.truncf %7 : vector<48x128xf32> to vector<48x128xbf16>
    %cst_5 = arith.constant dense<0.000000e+00> : vector<16x128xf32>
    %10 = tpu.matmul %8, %9, %cst_5 {dimension_numbers = #tpu.dot_dimension_numbers<[1], [0], [0], [1], [0, 0, 1, 1], [], []>} : vector<16x48xbf16>, vector<48x128xbf16>, vector<16x128xf32> -> vector<16x128xf32>
    %cst_6 = arith.constant 1.000000e+00 : f32
    %11 = vector.broadcast %cst_6 : f32 to vector<1x128xf32>
    %cst_7 = arith.constant 0.000000e+00 : f32
    %12 = vector.broadcast %cst_7 : f32 to vector<15x128xf32>
    %13 = tpu.concatenate %10, %11, %12 in 0 : vector<16x128xf32>, vector<1x128xf32>, vector<15x128xf32> -> vector<32x128xf32>
    %c0_8 = arith.constant 0 : index
    %c0_9 = arith.constant 0 : index
    %14 = vector.load %arg1[%c0_8, %c0_9] : memref<1x128xf32, #tpu.memory_space<vmem>>, vector<1x128xf32>
    %c0_10 = arith.constant 0 : index
    %c0_11 = arith.constant 0 : index
    %15 = vector.load %arg4[%c0_10, %c0_11] : memref<32x1xf32, #tpu.memory_space<vmem>>, vector<32x1xf32>
    %16 = vector.broadcast %15 : vector<32x1xf32> to vector<32x128xf32>
    %17 = vector.broadcast %14 : vector<1x128xf32> to vector<32x128xf32>
    %18 = arith.mulf %16, %17 : vector<32x128xf32>
    %c0_12 = arith.constant 0 : index
    %c0_13 = arith.constant 0 : index
    %19 = vector.load %arg5[%c0_12, %c0_13] : memref<32x1xf32, #tpu.memory_space<vmem>>, vector<32x1xf32>
    %20 = vector.broadcast %19 : vector<32x1xf32> to vector<32x128xf32>
    %21 = arith.addf %18, %20 : vector<32x128xf32>
    %22 = tpu.iota {dimensions = array<i32: 1>} : vector<1x128xi32>
    %c64_i32 = arith.constant 64 : i32
    %c0_i32 = arith.constant 0 : i32
    %23 = arith.cmpi eq, %c64_i32, %c0_i32 : i32
    %c1_i32 = arith.constant 1 : i32
    %24 = arith.select %23, %c1_i32, %c64_i32 : i32
    %25 = vector.broadcast %24 : i32 to vector<1x128xi32>
    %26 = arith.remsi %22, %25 : vector<1x128xi32>
    %c0_i32_14 = arith.constant 0 : i32
    %27 = vector.broadcast %c0_i32_14 : i32 to vector<1x128xi32>
    %28 = arith.cmpi ne, %26, %27 : vector<1x128xi32>
    %c0_i32_15 = arith.constant 0 : i32
    %29 = vector.broadcast %c0_i32_15 : i32 to vector<1x128xi32>
    %30 = arith.cmpi slt, %26, %29 : vector<1x128xi32>
    %c0_i32_16 = arith.constant 0 : i32
    %31 = arith.cmpi slt, %24, %c0_i32_16 : i32
    %32 = vector.broadcast %31 : i1 to vector<1x128xi1>
    %33 = vector.broadcast %32 : vector<1x128xi1> to vector<1x128xi1>
    %34 = arith.xori %30, %33 : vector<1x128xi1>
    %35 = arith.andi %34, %28 : vector<1x128xi1>
    %36 = vector.broadcast %24 : i32 to vector<1x128xi32>
    %37 = arith.addi %26, %36 : vector<1x128xi32>
    %38 = arith.select %35, %37, %26 : vector<1x128xi1>, vector<1x128xi32>
    %c-2_i32 = arith.constant -2 : i32
    %39 = vector.broadcast %c-2_i32 : i32 to vector<1x128xi32>
    %40 = arith.addi %38, %39 : vector<1x128xi32>
    %c0_i32_17 = arith.constant 0 : i32
    %41 = vector.broadcast %c0_i32_17 : i32 to vector<1x128xi32>
    %42 = arith.cmpi sge, %40, %41 : vector<1x128xi32>
    %c-2_i32_18 = arith.constant -2 : i32
    %43 = vector.broadcast %c-2_i32_18 : i32 to vector<1x128xi32>
    %44 = arith.addi %38, %43 : vector<1x128xi32>
    %c64_i32_19 = arith.constant 64 : i32
    %45 = vector.broadcast %c64_i32_19 : i32 to vector<1x128xi32>
    %46 = arith.cmpi slt, %44, %45 : vector<1x128xi32>
    %47 = arith.andi %42, %46 : vector<1x128xi1>
    %c-1_i32 = arith.constant -1 : i32
    %48 = vector.broadcast %c-1_i32 : i32 to vector<1x128xi32>
    %49 = arith.addi %38, %48 : vector<1x128xi32>
    %c0_i32_20 = arith.constant 0 : i32
    %50 = vector.broadcast %c0_i32_20 : i32 to vector<1x128xi32>
    %51 = arith.cmpi sge, %49, %50 : vector<1x128xi32>
    %c-1_i32_21 = arith.constant -1 : i32
    %52 = vector.broadcast %c-1_i32_21 : i32 to vector<1x128xi32>
    %53 = arith.addi %38, %52 : vector<1x128xi32>
    %c64_i32_22 = arith.constant 64 : i32
    %54 = vector.broadcast %c64_i32_22 : i32 to vector<1x128xi32>
    %55 = arith.cmpi slt, %53, %54 : vector<1x128xi32>
    %56 = arith.andi %51, %55 : vector<1x128xi1>
    %c1_i32_23 = arith.constant 1 : i32
    %57 = vector.broadcast %c1_i32_23 : i32 to vector<1x128xi32>
    %58 = arith.addi %38, %57 : vector<1x128xi32>
    %c0_i32_24 = arith.constant 0 : i32
    %59 = vector.broadcast %c0_i32_24 : i32 to vector<1x128xi32>
    %60 = arith.cmpi sge, %58, %59 : vector<1x128xi32>
    %c1_i32_25 = arith.constant 1 : i32
    %61 = vector.broadcast %c1_i32_25 : i32 to vector<1x128xi32>
    %62 = arith.addi %38, %61 : vector<1x128xi32>
    %c64_i32_26 = arith.constant 64 : i32
    %63 = vector.broadcast %c64_i32_26 : i32 to vector<1x128xi32>
    %64 = arith.cmpi slt, %62, %63 : vector<1x128xi32>
    %65 = arith.andi %60, %64 : vector<1x128xi1>
    %c2_i32 = arith.constant 2 : i32
    %66 = vector.broadcast %c2_i32 : i32 to vector<1x128xi32>
    %67 = arith.addi %38, %66 : vector<1x128xi32>
    %c0_i32_27 = arith.constant 0 : i32
    %68 = vector.broadcast %c0_i32_27 : i32 to vector<1x128xi32>
    %69 = arith.cmpi sge, %67, %68 : vector<1x128xi32>
    %c2_i32_28 = arith.constant 2 : i32
    %70 = vector.broadcast %c2_i32_28 : i32 to vector<1x128xi32>
    %71 = arith.addi %38, %70 : vector<1x128xi32>
    %c64_i32_29 = arith.constant 64 : i32
    %72 = vector.broadcast %c64_i32_29 : i32 to vector<1x128xi32>
    %73 = arith.cmpi slt, %71, %72 : vector<1x128xi32>
    %74 = arith.andi %69, %73 : vector<1x128xi1>
    %cst_30 = arith.constant 0.000000e+00 : f32
    %75 = vector.broadcast %cst_30 : f32 to vector<32x128xf32>
    %c1_i32_31 = arith.constant 1 : i32
    %76 = tpu.dynamic_rotate %21 by %c1_i32_31 dim 1 : vector<32x128xf32>, i32 -> vector<32x128xf32>
    %cst_32 = arith.constant 0.000000e+00 : f32
    %77 = vector.shape_cast %56 : vector<1x128xi1> to vector<1x128xi1>
    %78 = vector.broadcast %77 : vector<1x128xi1> to vector<32x128xi1>
    %79 = vector.broadcast %cst_32 : f32 to vector<32x128xf32>
    %80 = arith.select %78, %76, %79 : vector<32x128xi1>, vector<32x128xf32>
    %c127_i32 = arith.constant 127 : i32
    %81 = tpu.dynamic_rotate %21 by %c127_i32 dim 1 : vector<32x128xf32>, i32 -> vector<32x128xf32>
    %cst_33 = arith.constant 0.000000e+00 : f32
    %82 = vector.shape_cast %65 : vector<1x128xi1> to vector<1x128xi1>
    %83 = vector.broadcast %82 : vector<1x128xi1> to vector<32x128xi1>
    %84 = vector.broadcast %cst_33 : f32 to vector<32x128xf32>
    %85 = arith.select %83, %81, %84 : vector<32x128xi1>, vector<32x128xf32>
    %86 = tpu.concatenate %80, %21, %85, %13 in 0 : vector<32x128xf32>, vector<32x128xf32>, vector<32x128xf32>, vector<32x128xf32> -> vector<128x128xf32>
    %87 = arith.truncf %86 : vector<128x128xf32> to vector<128x128xbf16>
    %c0_34 = arith.constant 0 : index
    %c0_35 = arith.constant 0 : index
    %88 = vector.load %arg6[%c0_34, %c0_35] : memref<256x128xbf16, #tpu.memory_space<vmem>>, vector<64x128xbf16>
    %cst_36 = arith.constant dense<0.000000e+00> : vector<64x128xf32>
    %89 = tpu.matmul %88, %87, %cst_36 {dimension_numbers = #tpu.dot_dimension_numbers<[1], [0], [0], [1], [0, 0, 1, 1], [], []>} : vector<64x128xbf16>, vector<128x128xbf16>, vector<64x128xf32> -> vector<64x128xf32>
    %90 = vector.extract_strided_slice %89 {offsets = [0, 0], sizes = [32, 128], strides = [1, 1]} : vector<64x128xf32> to vector<32x128xf32>
    %91 = math.tanh %90 : vector<32x128xf32>
    %92 = vector.extract_strided_slice %89 {offsets = [32, 0], sizes = [32, 128], strides = [1, 1]} : vector<64x128xf32> to vector<32x128xf32>
    %93 = arith.negf %92 : vector<32x128xf32>
    %94 = math.exp %93 : vector<32x128xf32>
    %cst_37 = arith.constant 1.000000e+00 : f32
    %95 = vector.broadcast %cst_37 : f32 to vector<32x128xf32>
    %96 = arith.addf %95, %94 : vector<32x128xf32>
    %97 = arith.divf %95, %96 : vector<32x128xf32>
    %98 = arith.mulf %91, %97 : vector<32x128xf32>
    %99 = tpu.concatenate %98, %13 in 0 : vector<32x128xf32>, vector<32x128xf32> -> vector<64x128xf32>
    %100 = arith.truncf %99 : vector<64x128xf32> to vector<64x128xbf16>
    %c0_38 = arith.constant 0 : index
    %c0_39 = arith.constant 0 : index
    %101 = vector.load %arg7[%c0_38, %c0_39] : memref<256x64xbf16, #tpu.memory_space<vmem>>, vector<64x64xbf16>
    %cst_40 = arith.constant dense<0.000000e+00> : vector<64x128xf32>
    %102 = tpu.matmul %101, %100, %cst_40 {dimension_numbers = #tpu.dot_dimension_numbers<[1], [0], [0], [1], [0, 0, 1, 1], [], []>} : vector<64x64xbf16>, vector<64x128xbf16>, vector<64x128xf32> -> vector<64x128xf32>
    %103 = vector.extract_strided_slice %102 {offsets = [0, 0], sizes = [32, 128], strides = [1, 1]} : vector<64x128xf32> to vector<32x128xf32>
    %104 = arith.addf %103, %21 : vector<32x128xf32>
    %cst_41 = arith.constant 0.707106769 : f32
    %105 = vector.broadcast %cst_41 : f32 to vector<32x128xf32>
    %106 = arith.mulf %104, %105 : vector<32x128xf32>
    %107 = vector.extract_strided_slice %102 {offsets = [32, 0], sizes = [32, 128], strides = [1, 1]} : vector<64x128xf32> to vector<32x128xf32>
    %108 = arith.addf %75, %107 : vector<32x128xf32>
    %c2_i32_42 = arith.constant 2 : i32
    %109 = tpu.dynamic_rotate %106 by %c2_i32_42 dim 1 : vector<32x128xf32>, i32 -> vector<32x128xf32>
    %cst_43 = arith.constant 0.000000e+00 : f32
    %110 = vector.shape_cast %47 : vector<1x128xi1> to vector<1x128xi1>
    %111 = vector.broadcast %110 : vector<1x128xi1> to vector<32x128xi1>
    %112 = vector.broadcast %cst_43 : f32 to vector<32x128xf32>
    %113 = arith.select %111, %109, %112 : vector<32x128xi1>, vector<32x128xf32>
    %c126_i32 = arith.constant 126 : i32
    %114 = tpu.dynamic_rotate %106 by %c126_i32 dim 1 : vector<32x128xf32>, i32 -> vector<32x128xf32>
    %cst_44 = arith.constant 0.000000e+00 : f32
    %115 = vector.shape_cast %74 : vector<1x128xi1> to vector<1x128xi1>
    %116 = vector.broadcast %115 : vector<1x128xi1> to vector<32x128xi1>
    %117 = vector.broadcast %cst_44 : f32 to vector<32x128xf32>
    %118 = arith.select %116, %114, %117 : vector<32x128xi1>, vector<32x128xf32>
    %119 = tpu.concatenate %113, %106, %118, %13 in 0 : vector<32x128xf32>, vector<32x128xf32>, vector<32x128xf32>, vector<32x128xf32> -> vector<128x128xf32>
    %120 = arith.truncf %119 : vector<128x128xf32> to vector<128x128xbf16>
    %c64 = arith.constant 64 : index
    %c0_45 = arith.constant 0 : index
    %121 = vector.load %arg6[%c64, %c0_45] : memref<256x128xbf16, #tpu.memory_space<vmem>>, vector<64x128xbf16>
    %cst_46 = arith.constant dense<0.000000e+00> : vector<64x128xf32>
    %122 = tpu.matmul %121, %120, %cst_46 {dimension_numbers = #tpu.dot_dimension_numbers<[1], [0], [0], [1], [0, 0, 1, 1], [], []>} : vector<64x128xbf16>, vector<128x128xbf16>, vector<64x128xf32> -> vector<64x128xf32>
    %123 = vector.extract_strided_slice %122 {offsets = [0, 0], sizes = [32, 128], strides = [1, 1]} : vector<64x128xf32> to vector<32x128xf32>
    %124 = math.tanh %123 : vector<32x128xf32>
    %125 = vector.extract_strided_slice %122 {offsets = [32, 0], sizes = [32, 128], strides = [1, 1]} : vector<64x128xf32> to vector<32x128xf32>
    %126 = arith.negf %125 : vector<32x128xf32>
    %127 = math.exp %126 : vector<32x128xf32>
    %cst_47 = arith.constant 1.000000e+00 : f32
    %128 = vector.broadcast %cst_47 : f32 to vector<32x128xf32>
    %129 = arith.addf %128, %127 : vector<32x128xf32>
    %130 = arith.divf %128, %129 : vector<32x128xf32>
    %131 = arith.mulf %124, %130 : vector<32x128xf32>
    %132 = tpu.concatenate %131, %13 in 0 : vector<32x128xf32>, vector<32x128xf32> -> vector<64x128xf32>
    %133 = arith.truncf %132 : vector<64x128xf32> to vector<64x128xbf16>
    %c64_48 = arith.constant 64 : index
    %c0_49 = arith.constant 0 : index
    %134 = vector.load %arg7[%c64_48, %c0_49] : memref<256x64xbf16, #tpu.memory_space<vmem>>, vector<64x64xbf16>
    %cst_50 = arith.constant dense<0.000000e+00> : vector<64x128xf32>
    %135 = tpu.matmul %134, %133, %cst_50 {dimension_numbers = #tpu.dot_dimension_numbers<[1], [0], [0], [1], [0, 0, 1, 1], [], []>} : vector<64x64xbf16>, vector<64x128xbf16>, vector<64x128xf32> -> vector<64x128xf32>
    %136 = vector.extract_strided_slice %135 {offsets = [0, 0], sizes = [32, 128], strides = [1, 1]} : vector<64x128xf32> to vector<32x128xf32>
    %137 = arith.addf %136, %106 : vector<32x128xf32>
    %cst_51 = arith.constant 0.707106769 : f32
    %138 = vector.broadcast %cst_51 : f32 to vector<32x128xf32>
    %139 = arith.mulf %137, %138 : vector<32x128xf32>
    %140 = vector.extract_strided_slice %135 {offsets = [32, 0], sizes = [32, 128], strides = [1, 1]} : vector<64x128xf32> to vector<32x128xf32>
    %141 = arith.addf %108, %140 : vector<32x128xf32>
    %c1_i32_52 = arith.constant 1 : i32
    %142 = tpu.dynamic_rotate %139 by %c1_i32_52 dim 1 : vector<32x128xf32>, i32 -> vector<32x128xf32>
    %cst_53 = arith.constant 0.000000e+00 : f32
    %143 = vector.shape_cast %56 : vector<1x128xi1> to vector<1x128xi1>
    %144 = vector.broadcast %143 : vector<1x128xi1> to vector<32x128xi1>
    %145 = vector.broadcast %cst_53 : f32 to vector<32x128xf32>
    %146 = arith.select %144, %142, %145 : vector<32x128xi1>, vector<32x128xf32>
    %c127_i32_54 = arith.constant 127 : i32
    %147 = tpu.dynamic_rotate %139 by %c127_i32_54 dim 1 : vector<32x128xf32>, i32 -> vector<32x128xf32>
    %cst_55 = arith.constant 0.000000e+00 : f32
    %148 = vector.shape_cast %65 : vector<1x128xi1> to vector<1x128xi1>
    %149 = vector.broadcast %148 : vector<1x128xi1> to vector<32x128xi1>
    %150 = vector.broadcast %cst_55 : f32 to vector<32x128xf32>
    %151 = arith.select %149, %147, %150 : vector<32x128xi1>, vector<32x128xf32>
    %152 = tpu.concatenate %146, %139, %151, %13 in 0 : vector<32x128xf32>, vector<32x128xf32>, vector<32x128xf32>, vector<32x128xf32> -> vector<128x128xf32>
    %153 = arith.truncf %152 : vector<128x128xf32> to vector<128x128xbf16>
    %c128 = arith.constant 128 : index
    %c0_56 = arith.constant 0 : index
    %154 = vector.load %arg6[%c128, %c0_56] : memref<256x128xbf16, #tpu.memory_space<vmem>>, vector<64x128xbf16>
    %cst_57 = arith.constant dense<0.000000e+00> : vector<64x128xf32>
    %155 = tpu.matmul %154, %153, %cst_57 {dimension_numbers = #tpu.dot_dimension_numbers<[1], [0], [0], [1], [0, 0, 1, 1], [], []>} : vector<64x128xbf16>, vector<128x128xbf16>, vector<64x128xf32> -> vector<64x128xf32>
    %156 = vector.extract_strided_slice %155 {offsets = [0, 0], sizes = [32, 128], strides = [1, 1]} : vector<64x128xf32> to vector<32x128xf32>
    %157 = math.tanh %156 : vector<32x128xf32>
    %158 = vector.extract_strided_slice %155 {offsets = [32, 0], sizes = [32, 128], strides = [1, 1]} : vector<64x128xf32> to vector<32x128xf32>
    %159 = arith.negf %158 : vector<32x128xf32>
    %160 = math.exp %159 : vector<32x128xf32>
    %cst_58 = arith.constant 1.000000e+00 : f32
    %161 = vector.broadcast %cst_58 : f32 to vector<32x128xf32>
    %162 = arith.addf %161, %160 : vector<32x128xf32>
    %163 = arith.divf %161, %162 : vector<32x128xf32>
    %164 = arith.mulf %157, %163 : vector<32x128xf32>
    %165 = tpu.concatenate %164, %13 in 0 : vector<32x128xf32>, vector<32x128xf32> -> vector<64x128xf32>
    %166 = arith.truncf %165 : vector<64x128xf32> to vector<64x128xbf16>
    %c128_59 = arith.constant 128 : index
    %c0_60 = arith.constant 0 : index
    %167 = vector.load %arg7[%c128_59, %c0_60] : memref<256x64xbf16, #tpu.memory_space<vmem>>, vector<64x64xbf16>
    %cst_61 = arith.constant dense<0.000000e+00> : vector<64x128xf32>
    %168 = tpu.matmul %167, %166, %cst_61 {dimension_numbers = #tpu.dot_dimension_numbers<[1], [0], [0], [1], [0, 0, 1, 1], [], []>} : vector<64x64xbf16>, vector<64x128xbf16>, vector<64x128xf32> -> vector<64x128xf32>
    %169 = vector.extract_strided_slice %168 {offsets = [0, 0], sizes = [32, 128], strides = [1, 1]} : vector<64x128xf32> to vector<32x128xf32>
    %170 = arith.addf %169, %139 : vector<32x128xf32>
    %cst_62 = arith.constant 0.707106769 : f32
    %171 = vector.broadcast %cst_62 : f32 to vector<32x128xf32>
    %172 = arith.mulf %170, %171 : vector<32x128xf32>
    %173 = vector.extract_strided_slice %168 {offsets = [32, 0], sizes = [32, 128], strides = [1, 1]} : vector<64x128xf32> to vector<32x128xf32>
    %174 = arith.addf %141, %173 : vector<32x128xf32>
    %c2_i32_63 = arith.constant 2 : i32
    %175 = tpu.dynamic_rotate %172 by %c2_i32_63 dim 1 : vector<32x128xf32>, i32 -> vector<32x128xf32>
    %cst_64 = arith.constant 0.000000e+00 : f32
    %176 = vector.shape_cast %47 : vector<1x128xi1> to vector<1x128xi1>
    %177 = vector.broadcast %176 : vector<1x128xi1> to vector<32x128xi1>
    %178 = vector.broadcast %cst_64 : f32 to vector<32x128xf32>
    %179 = arith.select %177, %175, %178 : vector<32x128xi1>, vector<32x128xf32>
    %c126_i32_65 = arith.constant 126 : i32
    %180 = tpu.dynamic_rotate %172 by %c126_i32_65 dim 1 : vector<32x128xf32>, i32 -> vector<32x128xf32>
    %cst_66 = arith.constant 0.000000e+00 : f32
    %181 = vector.shape_cast %74 : vector<1x128xi1> to vector<1x128xi1>
    %182 = vector.broadcast %181 : vector<1x128xi1> to vector<32x128xi1>
    %183 = vector.broadcast %cst_66 : f32 to vector<32x128xf32>
    %184 = arith.select %182, %180, %183 : vector<32x128xi1>, vector<32x128xf32>
    %185 = tpu.concatenate %179, %172, %184, %13 in 0 : vector<32x128xf32>, vector<32x128xf32>, vector<32x128xf32>, vector<32x128xf32> -> vector<128x128xf32>
    %186 = arith.truncf %185 : vector<128x128xf32> to vector<128x128xbf16>
    %c192 = arith.constant 192 : index
    %c0_67 = arith.constant 0 : index
    %187 = vector.load %arg6[%c192, %c0_67] : memref<256x128xbf16, #tpu.memory_space<vmem>>, vector<64x128xbf16>
    %cst_68 = arith.constant dense<0.000000e+00> : vector<64x128xf32>
    %188 = tpu.matmul %187, %186, %cst_68 {dimension_numbers = #tpu.dot_dimension_numbers<[1], [0], [0], [1], [0, 0, 1, 1], [], []>} : vector<64x128xbf16>, vector<128x128xbf16>, vector<64x128xf32> -> vector<64x128xf32>
    %189 = vector.extract_strided_slice %188 {offsets = [0, 0], sizes = [32, 128], strides = [1, 1]} : vector<64x128xf32> to vector<32x128xf32>
    %190 = math.tanh %189 : vector<32x128xf32>
    %191 = vector.extract_strided_slice %188 {offsets = [32, 0], sizes = [32, 128], strides = [1, 1]} : vector<64x128xf32> to vector<32x128xf32>
    %192 = arith.negf %191 : vector<32x128xf32>
    %193 = math.exp %192 : vector<32x128xf32>
    %cst_69 = arith.constant 1.000000e+00 : f32
    %194 = vector.broadcast %cst_69 : f32 to vector<32x128xf32>
    %195 = arith.addf %194, %193 : vector<32x128xf32>
    %196 = arith.divf %194, %195 : vector<32x128xf32>
    %197 = arith.mulf %190, %196 : vector<32x128xf32>
    %198 = tpu.concatenate %197, %13 in 0 : vector<32x128xf32>, vector<32x128xf32> -> vector<64x128xf32>
    %199 = arith.truncf %198 : vector<64x128xf32> to vector<64x128xbf16>
    %c192_70 = arith.constant 192 : index
    %c0_71 = arith.constant 0 : index
    %200 = vector.load %arg7[%c192_70, %c0_71] : memref<256x64xbf16, #tpu.memory_space<vmem>>, vector<64x64xbf16>
    %cst_72 = arith.constant dense<0.000000e+00> : vector<64x128xf32>
    %201 = tpu.matmul %200, %199, %cst_72 {dimension_numbers = #tpu.dot_dimension_numbers<[1], [0], [0], [1], [0, 0, 1, 1], [], []>} : vector<64x64xbf16>, vector<64x128xbf16>, vector<64x128xf32> -> vector<64x128xf32>
    %202 = vector.extract_strided_slice %201 {offsets = [32, 0], sizes = [32, 128], strides = [1, 1]} : vector<64x128xf32> to vector<32x128xf32>
    %203 = arith.addf %174, %202 : vector<32x128xf32>
    %cst_73 = arith.constant 0.000000e+00 : f32
    %204 = vector.broadcast %cst_73 : f32 to vector<32x128xf32>
    %205 = arith.maximumf %203, %204 : vector<32x128xf32>
    %206 = tpu.concatenate %205, %13 in 0 : vector<32x128xf32>, vector<32x128xf32> -> vector<64x128xf32>
    %207 = arith.truncf %206 : vector<64x128xf32> to vector<64x128xbf16>
    %c0_74 = arith.constant 0 : index
    %c0_75 = arith.constant 0 : index
    %208 = vector.load %arg8[%c0_74, %c0_75] : memref<32x64xbf16, #tpu.memory_space<vmem>>, vector<32x64xbf16>
    %cst_76 = arith.constant dense<0.000000e+00> : vector<32x128xf32>
    %209 = tpu.matmul %208, %207, %cst_76 {dimension_numbers = #tpu.dot_dimension_numbers<[1], [0], [0], [1], [0, 0, 1, 1], [], []>} : vector<32x64xbf16>, vector<64x128xbf16>, vector<32x128xf32> -> vector<32x128xf32>
    %cst_77 = arith.constant 0.000000e+00 : f32
    %210 = vector.broadcast %cst_77 : f32 to vector<32x128xf32>
    %211 = arith.maximumf %209, %210 : vector<32x128xf32>
    %212 = tpu.concatenate %211, %13 in 0 : vector<32x128xf32>, vector<32x128xf32> -> vector<64x128xf32>
    %213 = arith.truncf %212 : vector<64x128xf32> to vector<64x128xbf16>
    %c0_78 = arith.constant 0 : index
    %c0_79 = arith.constant 0 : index
    %214 = vector.load %arg9[%c0_78, %c0_79] : memref<1x64xbf16, #tpu.memory_space<vmem>>, vector<1x64xbf16>
    %cst_80 = arith.constant dense<0.000000e+00> : vector<1x128xf32>
    %215 = tpu.matmul %214, %213, %cst_80 {dimension_numbers = #tpu.dot_dimension_numbers<[1], [0], [0], [1], [0, 0, 1, 1], [], []>} : vector<1x64xbf16>, vector<64x128xbf16>, vector<1x128xf32> -> vector<1x128xf32>
    %c0_81 = arith.constant 0 : index
    %c0_82 = arith.constant 0 : index
    %216 = vector.load %arg10[%c0_81, %c0_82] : memref<1x128xf32, #tpu.memory_space<vmem>>, vector<1x128xf32>
    tpu.vector_store %arg10[%c0_81, %c0_82], %215 {strides = array<i32>} : memref<1x128xf32, #tpu.memory_space<vmem>>, vector<1x128xf32>,
    return
  }
}

</mosaic_0001>

<llo_original>
// kernel: _lambda_.1
$region0: #{_lambda_.1}
  #allocation0 [shape = 'u32[]', space=smem, size = 0x4, offset = 0x4, fixed_abs, tag = 'smem constant byte address 0x4 - core index']
  #allocation1 [shape = 'u32[144,128]{1,0:T(1,128)}', space=vmem, size = 0x12000, scoped, tag = 'internal scratch']
  %s0 = inlined_call_operand.vmem [shape: f32[16,16], index: 0, kind: input, shape index: {}]
  %s1 = inlined_call_operand.vmem [shape: f32[1,128], index: 1, kind: input, shape index: {}]
  %s2 = inlined_call_operand.vmem [shape: bf16[16,48], index: 2, kind: input, shape index: {}]
  %s3 = inlined_call_operand.vmem [shape: bf16[16,384], index: 3, kind: input, shape index: {}]
  %s4 = inlined_call_operand.vmem [shape: f32[32,1], index: 4, kind: input, shape index: {}]
  %s5 = inlined_call_operand.vmem [shape: f32[32,1], index: 5, kind: input, shape index: {}]
  %s6 = inlined_call_operand.vmem [shape: bf16[256,128], index: 6, kind: input, shape index: {}]
  %s7 = inlined_call_operand.vmem [shape: bf16[256,64], index: 7, kind: input, shape index: {}]
  %s8 = inlined_call_operand.vmem [shape: bf16[32,64], index: 8, kind: input, shape index: {}]
  %s9 = inlined_call_operand.vmem [shape: bf16[1,64], index: 9, kind: input, shape index: {}]
  %s10 = inlined_call_operand.vmem [shape: f32[1,128], index: 10, kind: output, shape index: {}]
  %s11 = sld [smem:[#allocation0]]
  $region50: #{_lambda_.1} parent=0
    _
  %s13 = ssub.s32 1, %s11
  %s14 = scalar_select 0, %s13, %s11
  // Predicated region
  $region2: #{_lambda_.1} parent=0 // pred_check
    _
  $region3: #{_lambda_.1} parent=0 // pred_check_branch
    %16 = sbr.rel (0) target = $region5
  $region4: #{_lambda_.1} parent=0 // pred_region
    _
  $region5: #{_lambda_.1} parent=0 // pred_fallthru
    _
  // Predicated region
  $region6: #{_lambda_.1} parent=0 // pred_check
    _
  $region7: #{_lambda_.1} parent=0 // pred_check_branch
    %18 = sbr.rel (0) target = $region9
  $region8: #{_lambda_.1} parent=0 // pred_region
    _
  $region9: #{_lambda_.1} parent=0 // pred_fallthru
    _
  // Predicated region
  $region10: #{_lambda_.1} parent=0 // pred_check
    _
  $region11: #{_lambda_.1} parent=0 // pred_check_branch
    %20 = sbr.rel (0) target = $region13
  $region12: #{_lambda_.1} parent=0 // pred_region
    _
  $region13: #{_lambda_.1} parent=0 // pred_fallthru
    _
  // Predicated region
  $region14: #{_lambda_.1} parent=0 // pred_check
    _
  $region15: #{_lambda_.1} parent=0 // pred_check_branch
    %22 = sbr.rel (0) target = $region17
  $region16: #{_lambda_.1} parent=0 // pred_region
    _
  $region17: #{_lambda_.1} parent=0 // pred_fallthru
    _
  // Predicated region
  $region18: #{_lambda_.1} parent=0 // pred_check
    _
  $region19: #{_lambda_.1} parent=0 // pred_check_branch
    %24 = sbr.rel (0) target = $region21
  $region20: #{_lambda_.1} parent=0 // pred_region
    _
  $region21: #{_lambda_.1} parent=0 // pred_fallthru
    _
  // Predicated region
  $region22: #{_lambda_.1} parent=0 // pred_check
    _
  $region23: #{_lambda_.1} parent=0 // pred_check_branch
    %26 = sbr.rel (0) target = $region25
  $region24: #{_lambda_.1} parent=0 // pred_region
    _
  $region25: #{_lambda_.1} parent=0 // pred_fallthru
    _
  // Predicated region
  $region26: #{_lambda_.1} parent=0 // pred_check
    _
  $region27: #{_lambda_.1} parent=0 // pred_check_branch
    %28 = sbr.rel (0) target = $region29
  $region28: #{_lambda_.1} parent=0 // pred_region
    _
  $region29: #{_lambda_.1} parent=0 // pred_fallthru
    _
  // Predicated region
  $region30: #{_lambda_.1} parent=0 // pred_check
    _
  $region31: #{_lambda_.1} parent=0 // pred_check_branch
    %30 = sbr.rel (0) target = $region33
  $region32: #{_lambda_.1} parent=0 // pred_region
    _
  $region33: #{_lambda_.1} parent=0 // pred_fallthru
    _
  // Predicated region
  $region34: #{_lambda_.1} parent=0 // pred_check
    _
  $region35: #{_lambda_.1} parent=0 // pred_check_branch
    %32 = sbr.rel (0) target = $region37
  $region36: #{_lambda_.1} parent=0 // pred_region
    _
  $region37: #{_lambda_.1} parent=0 // pred_fallthru
    _
  // Predicated region
  $region38: #{_lambda_.1} parent=0 // pred_check
    _
  $region39: #{_lambda_.1} parent=0 // pred_check_branch
    %34 = sbr.rel (0) target = $region41
  $region40: #{_lambda_.1} parent=0 // pred_region
    _
  $region41: #{_lambda_.1} parent=0 // pred_fallthru
    _
  %v36 = vld [vmem:[%s0] sm:$0xff]
  %v37 = vld [vmem:[%s0 + $0x8] sm:$0xff]
  %v38 = vpack.c.bf16 %v37, %v36
  %v39 = vld [vmem:[%s3] sm:$0xff]
  %v40 = vld [vmem:[%s3 + $0x8] sm:$0xf]
  %v41 = vld [vmem:[%s3 + $0xc] sm:$0xff]
  %v42 = vld [vmem:[%s3 + $0x14] sm:$0xf]
  %v47 = vunpack.c.l.b16 %v39
  %v48 = vunpack.c.h.b16 %v39
  %v49 = vunpack.c.l.b16 %v40
  %v50 = vunpack.c.l.b16 %v41
  %v51 = vunpack.c.h.b16 %v41
  %v52 = vunpack.c.l.b16 %v42
  %v53 = vpack.c.b16 %v50, %v47
  %v54 = vpack.c.b16 %v51, %v48
  %v55 = vpack.c.b16 %v52, %v49
  %vm59 = vcmask 130048
  %v61 = vsel %vm59, %v38, 0
  %63 = vmatprep.subr.bf16.mxu0 %v54
  %64 = vmatpush1.bf16.msra.mxu0 %v53
  %65 = vmatprep.subr.bf16.mxu0 0
  %66 = vmatpush1.bf16.msra.mxu0 0
  %67 = vmatprep.subr.bf16.mxu0 0
  %68 = vmatpush1.bf16.msra.mxu0 0
  %69 = vmatprep.subr.bf16.mxu0 0
  %70 = vmatpush1.bf16.msra.mxu0 0
  %71 = vmatprep.subr.bf16.mxu0 0
  %72 = vmatpush1.bf16.msra.mxu0 0
  %73 = vmatprep.subr.bf16.mxu0 0
  %74 = vmatpush1.bf16.msra.mxu0 0
  %75 = vmatprep.subr.bf16.mxu0 0
  %76 = vmatpush1.bf16.msra.mxu0 0
  %77 = vmatprep.subr.bf16.mxu0 0
  %78 = vmatpush1.bf16.msra.mxu0 0
  %79 = vmatprep.subr.bf16.mxu0 0
  %80 = vmatpush1.bf16.msra.mxu0 0
  %81 = vmatprep.subr.bf16.mxu0 0
  %82 = vmatpush1.bf16.msra.mxu0 0
  %83 = vmatprep.subr.bf16.mxu0 0
  %84 = vmatpush1.bf16.msra.mxu0 0
  %85 = vmatprep.subr.bf16.mxu0 0
  %86 = vmatpush1.bf16.msra.mxu0 0
  %87 = vmatprep.subr.bf16.mxu0 0
  %88 = vmatpush1.bf16.msra.mxu0 0
  %89 = vmatprep.subr.bf16.mxu0 0
  %90 = vmatpush1.bf16.msra.mxu0 0
  %91 = vmatprep.subr.bf16.mxu0 0
  %92 = vmatpush1.bf16.msra.mxu0 0
  %93 = vmatprep.subr.bf16.mxu0 0
  %94 = vmatpush1.bf16.msra.mxu0 0
  %95 = vmatprep.mubr.bf16.mxu0 0
  %96 = vmatmul.mubr.bf16.gmra.mrb[0].mxu0 %v61
  %v97 = vpop.f32.mrb[0].mxu0
  %v98 = vadd.f32 0.0, %v97
  %v99 = vpop.f32.mrb[0].mxu0
  %v100 = vadd.f32 0.0, %v99
  %v101 = vpop.f32.mrb[0].mxu0
  %v102 = vadd.f32 0.0, %v101
  %v103 = vpop.f32.mrb[0].mxu0
  %v104 = vadd.f32 0.0, %v103
  %105 = vdwg.mxu0
  %106 = vmatprep.subr.bf16.mxu0 0
  %107 = vmatpush1.bf16.msra.mxu0 %v55
  %108 = vmatprep.subr.bf16.mxu0 0
  %109 = vmatpush1.bf16.msra.mxu0 0
  %110 = vmatprep.subr.bf16.mxu0 0
  %111 = vmatpush1.bf16.msra.mxu0 0
  %112 = vmatprep.subr.bf16.mxu0 0
  %113 = vmatpush1.bf16.msra.mxu0 0
  %114 = vmatprep.subr.bf16.mxu0 0
  %115 = vmatpush1.bf16.msra.mxu0 0
  %116 = vmatprep.subr.bf16.mxu0 0
  %117 = vmatpush1.bf16.msra.mxu0 0
  %118 = vmatprep.subr.bf16.mxu0 0
  %119 = vmatpush1.bf16.msra.mxu0 0
  %120 = vmatprep.subr.bf16.mxu0 0
  %121 = vmatpush1.bf16.msra.mxu0 0
  %122 = vmatprep.subr.bf16.mxu0 0
  %123 = vmatpush1.bf16.msra.mxu0 0
  %124 = vmatprep.subr.bf16.mxu0 0
  %125 = vmatpush1.bf16.msra.mxu0 0
  %126 = vmatprep.subr.bf16.mxu0 0
  %127 = vmatpush1.bf16.msra.mxu0 0
  %128 = vmatprep.subr.bf16.mxu0 0
  %129 = vmatpush1.bf16.msra.mxu0 0
  %130 = vmatprep.subr.bf16.mxu0 0
  %131 = vmatpush1.bf16.msra.mxu0 0
  %132 = vmatprep.subr.bf16.mxu0 0
  %133 = vmatpush1.bf16.msra.mxu0 0
  %134 = vmatprep.subr.bf16.mxu0 0
  %135 = vmatpush1.bf16.msra.mxu0 0
  %136 = vmatprep.subr.bf16.mxu0 0
  %137 = vmatpush1.bf16.msra.mxu0 0
  %138 = vmatprep.mubr.bf16.mxu0 0
  %139 = vmatmul.mubr.bf16.gmra.mrb[0].mxu0 %v61
  %v140 = vpop.f32.mrb[0].mxu0
  %v141 = vadd.f32 0.0, %v140
  %v142 = vpop.f32.mrb[0].mxu0
  %v143 = vpop.f32.mrb[0].mxu0
  %v144 = vadd.f32 0.0, %v143
  %v145 = vpop.f32.mrb[0].mxu0
  %146 = vdwg.mxu0
  %v147 = vld [vmem:[%s2] sm:$0xf]
  %v148 = vld [vmem:[%s2 + $0x4] sm:$0xf]
  %v149 = vpack.c.bf16 %v102, %v98
  %v150 = vpack.c.bf16 %v104, %v100
  %v151 = vpack.c.bf16 %v144, %v141
  %v154 = vunpack.c.l.b16 %v147
  %v155 = vunpack.c.l.b16 %v148
  %v156 = vpack.c.b16 %v155, %v154
  %vm157 = vcmask 392192
  %v159 = vsel %vm157, %v156, 0
  %161 = vmatprep.subr.bf16.mxu0 0
  %162 = vmatpush1.bf16.msra.mxu0 %v149
  %163 = vmatprep.subr.bf16.mxu0 0
  %164 = vmatpush1.bf16.msra.mxu0 %v150
  %165 = vmatprep.subr.bf16.mxu0 0
  %166 = vmatpush1.bf16.msra.mxu0 %v151
  %167 = vmatprep.subr.bf16.mxu0 0
  %168 = vmatpush1.bf16.msra.mxu0 0
  %169 = vmatprep.subr.bf16.mxu0 0
  %170 = vmatpush1.bf16.msra.mxu0 0
  %171 = vmatprep.subr.bf16.mxu0 0
  %172 = vmatpush1.bf16.msra.mxu0 0
  %173 = vmatprep.subr.bf16.mxu0 0
  %174 = vmatpush1.bf16.msra.mxu0 0
  %175 = vmatprep.subr.bf16.mxu0 0
  %176 = vmatpush1.bf16.msra.mxu0 0
  %177 = vmatprep.subr.bf16.mxu0 0
  %178 = vmatpush1.bf16.msra.mxu0 0
  %179 = vmatprep.subr.bf16.mxu0 0
  %180 = vmatpush1.bf16.msra.mxu0 0
  %181 = vmatprep.subr.bf16.mxu0 0
  %182 = vmatpush1.bf16.msra.mxu0 0
  %183 = vmatprep.subr.bf16.mxu0 0
  %184 = vmatpush1.bf16.msra.mxu0 0
  %185 = vmatprep.subr.bf16.mxu0 0
  %186 = vmatpush1.bf16.msra.mxu0 0
  %187 = vmatprep.subr.bf16.mxu0 0
  %188 = vmatpush1.bf16.msra.mxu0 0
  %189 = vmatprep.subr.bf16.mxu0 0
  %190 = vmatpush1.bf16.msra.mxu0 0
  %191 = vmatprep.subr.bf16.mxu0 0
  %192 = vmatpush1.bf16.msra.mxu0 0
  %193 = vmatprep.mubr.bf16.mxu0 0
  %194 = vmatmul.mubr.bf16.gmra.mrb[0].mxu0 %v159
  %v195 = vpop.f32.mrb[0].mxu0
  %v196 = vadd.f32 0.0, %v195
  %v197 = vpop.f32.mrb[0].mxu0
  %v198 = vpop.f32.mrb[0].mxu0
  %v199 = vadd.f32 0.0, %v198
  %v200 = vpop.f32.mrb[0].mxu0
  %201 = vdwg.mxu0
  %vm202 = vcmask 1040384
  %v203 = vsel %vm202, 1.0, 0.0
  %v204 = vld [vmem:[%s1] sm:$0x1]
  %v205 = vld [vmem:[%s4] sm:$0xff]
  %v206 = vld [vmem:[%s4 + $0x8] sm:$0xff]
  %v207 = vld [vmem:[%s4 + $0x10] sm:$0xff]
  %v208 = vld [vmem:[%s4 + $0x18] sm:$0xff]
  %210 = vset.pattern.permute.xlu0 0
  %211 = vperm.xlu0 %210, %v205
  %v212 = vpop.permute.xlu0 %211
  %215 = vset.pattern.permute.xlu0 0
  %216 = vperm.xlu0 %215, %v206
  %v217 = vpop.permute.xlu0 %216
  %220 = vset.pattern.permute.xlu0 0
  %221 = vperm.xlu0 %220, %v207
  %v222 = vpop.permute.xlu0 %221
  %225 = vset.pattern.permute.xlu0 0
  %226 = vperm.xlu0 %225, %v208
  %v227 = vpop.permute.xlu0 %226
  %v230 = vlaneseq
  %v231 = vshrl.u32 %v230, 7
  %v232 = vsub.s32 0, %v231
  %v233 = vrot.slane %v204, %v232
  %v235 = vmul.f32 %v212, %v233
  %v236 = vmul.f32 %v217, %v233
  %v237 = vmul.f32 %v222, %v233
  %v238 = vmul.f32 %v227, %v233
  %v239 = vld [vmem:[%s5] sm:$0xff]
  %v240 = vld [vmem:[%s5 + $0x8] sm:$0xff]
  %v241 = vld [vmem:[%s5 + $0x10] sm:$0xff]
  %v242 = vld [vmem:[%s5 + $0x18] sm:$0xff]
  %244 = vset.pattern.permute.xlu0 0
  %245 = vperm.xlu0 %244, %v239
  %v246 = vpop.permute.xlu0 %245
  %249 = vset.pattern.permute.xlu0 0
  %250 = vperm.xlu0 %249, %v240
  %v251 = vpop.permute.xlu0 %250
  %254 = vset.pattern.permute.xlu0 0
  %255 = vperm.xlu0 %254, %v241
  %v256 = vpop.permute.xlu0 %255
  %259 = vset.pattern.permute.xlu0 0
  %260 = vperm.xlu0 %259, %v242
  %v261 = vpop.permute.xlu0 %260
  %v263 = vadd.f32 %v235, %v246
  %v264 = vadd.f32 %v236, %v251
  %v265 = vadd.f32 %v237, %v256
  %v266 = vadd.f32 %v238, %v261
  %v267 = vlaneseq
  %v268 = vand.u32 %v267, 127
  %vm269 = vcmp.lt.s32.totalorder %v268, 0
  %v270 = vsub.s32 0, %v268
  %v271 = vsel %vm269, %v270, %v268
  %v272 = vshrl.u32 %v271, 6
  %v273 = vand.u32 %v271, 63
  %v274 = vsub.s32 0, %v273
  %v275 = vsel %vm269, %v274, %v273
  %vm276 = vcmp.ne.s32.totalorder %v275, 0
  %vm277 = vcmp.lt.s32.totalorder %v275, 0
  %vm278 = vmand %vm277, %vm276
  %v279 = vadd.s32 %v275, 64
  %v280 = vsel %vm278, %v279, %v275
  %v281 = vadd.s32 %v280, 4294967294
  %vm282 = vcmp.ge.s32.totalorder %v281, 0
  %vm283 = vcmp.lt.s32.totalorder %v281, 64
  %vm284 = vmand %vm282, %vm283
  %v285 = vadd.s32 %v280, 4294967295
  %vm286 = vcmp.ge.s32.totalorder %v285, 0
  %vm287 = vcmp.lt.s32.totalorder %v285, 64
  %vm288 = vmand %vm286, %vm287
  %v289 = vadd.s32 %v280, 1
  %vm290 = vcmp.ge.s32.totalorder %v289, 0
  %vm291 = vcmp.lt.s32.totalorder %v289, 64
  %vm292 = vmand %vm290, %vm291
  %v293 = vadd.s32 %v280, 2
  %vm294 = vcmp.ge.s32.totalorder %v293, 0
  %vm295 = vcmp.lt.s32.totalorder %v293, 64
  %vm296 = vmand %vm294, %vm295
  %297 = vrot.lane.b32.xlu0 %v263, 1
  %v298 = vpop.permute.xlu0 %297
  %299 = vrot.lane.b32.xlu0 %v264, 1
  %v300 = vpop.permute.xlu0 %299
  %301 = vrot.lane.b32.xlu0 %v265, 1
  %v302 = vpop.permute.xlu0 %301
  %303 = vrot.lane.b32.xlu0 %v266, 1
  %v304 = vpop.permute.xlu0 %303
  %v305 = vsel %vm288, 1, 0
  %vm306 = vcmp.eq.s32.totalorder %v305, 1
  %v307 = vsel %vm306, %v298, 0.0
  %v308 = vsel %vm306, %v300, 0.0
  %v309 = vsel %vm306, %v302, 0.0
  %v310 = vsel %vm306, %v304, 0.0
  %311 = vrot.lane.b32.xlu0 %v263, 127
  %v312 = vpop.permute.xlu0 %311
  %313 = vrot.lane.b32.xlu0 %v264, 127
  %v314 = vpop.permute.xlu0 %313
  %315 = vrot.lane.b32.xlu0 %v265, 127
  %v316 = vpop.permute.xlu0 %315
  %317 = vrot.lane.b32.xlu0 %v266, 127
  %v318 = vpop.permute.xlu0 %317
  %v319 = vsel %vm292, 1, 0
  %vm320 = vcmp.eq.s32.totalorder %v319, 1
  %v321 = vsel %vm320, %v312, 0.0
  %v322 = vsel %vm320, %v314, 0.0
  %v323 = vsel %vm320, %v316, 0.0
  %v324 = vsel %vm320, %v318, 0.0
  %v325 = vpack.c.bf16 %v308, %v307
  %v326 = vpack.c.bf16 %v310, %v309
  %v327 = vpack.c.bf16 %v264, %v263
  %v328 = vpack.c.bf16 %v266, %v265
  %v329 = vpack.c.bf16 %v322, %v321
  %v330 = vpack.c.bf16 %v324, %v323
  %v331 = vpack.c.bf16 %v199, %v196
  %v332 = vpack.c.bf16 0.0, %v203
  %v333 = vld [vmem:[%s6] sm:$0xf]
  %v334 = vld [vmem:[%s6 + $0x4] sm:$0xf]
  %v335 = vld [vmem:[%s6 + $0x8] sm:$0xf]
  %v336 = vld [vmem:[%s6 + $0xc] sm:$0xf]
  %v337 = vld [vmem:[%s6 + $0x10] sm:$0xf]
  %v338 = vld [vmem:[%s6 + $0x14] sm:$0xf]
  %v339 = vld [vmem:[%s6 + $0x18] sm:$0xf]
  %v340 = vld [vmem:[%s6 + $0x1c] sm:$0xf]
  %v349 = vunpack.c.l.b16 %v333
  %v350 = vunpack.c.l.b16 %v334
  %v351 = vunpack.c.l.b16 %v335
  %v352 = vunpack.c.l.b16 %v336
  %v353 = vunpack.c.l.b16 %v337
  %v354 = vunpack.c.l.b16 %v338
  %v355 = vunpack.c.l.b16 %v339
  %v356 = vunpack.c.l.b16 %v340
  %v357 = vpack.c.b16 %v350, %v349
  %v358 = vpack.c.b16 %v352, %v351
  %v359 = vpack.c.b16 %v354, %v353
  %v360 = vpack.c.b16 %v356, %v355
  %365 = vmatprep.subr.bf16.mxu0 0
  %366 = vmatpush1.bf16.msra.mxu0 %v325
  %367 = vmatprep.subr.bf16.mxu0 0
  %368 = vmatpush1.bf16.msra.mxu0 %v326
  %369 = vmatprep.subr.bf16.mxu0 0
  %370 = vmatpush1.bf16.msra.mxu0 %v327
  %371 = vmatprep.subr.bf16.mxu0 0
  %372 = vmatpush1.bf16.msra.mxu0 %v328
  %373 = vmatprep.subr.bf16.mxu0 0
  %374 = vmatpush1.bf16.msra.mxu0 %v329
  %375 = vmatprep.subr.bf16.mxu0 0
  %376 = vmatpush1.bf16.msra.mxu0 %v330
  %377 = vmatprep.subr.bf16.mxu0 0
  %378 = vmatpush1.bf16.msra.mxu0 %v331
  %379 = vmatprep.subr.bf16.mxu0 0
  %380 = vmatpush1.bf16.msra.mxu0 %v332
  %381 = vmatprep.subr.bf16.mxu0 0
  %382 = vmatpush1.bf16.msra.mxu0 0
  %383 = vmatprep.subr.bf16.mxu0 0
  %384 = vmatpush1.bf16.msra.mxu0 0
  %385 = vmatprep.subr.bf16.mxu0 0
  %386 = vmatpush1.bf16.msra.mxu0 0
  %387 = vmatprep.subr.bf16.mxu0 0
  %388 = vmatpush1.bf16.msra.mxu0 0
  %389 = vmatprep.subr.bf16.mxu0 0
  %390 = vmatpush1.bf16.msra.mxu0 0
  %391 = vmatprep.subr.bf16.mxu0 0
  %392 = vmatpush1.bf16.msra.mxu0 0
  %393 = vmatprep.subr.bf16.mxu0 0
  %394 = vmatpush1.bf16.msra.mxu0 0
  %395 = vmatprep.subr.bf16.mxu0 0
  %396 = vmatpush1.bf16.msra.mxu0 0
  %397 = vmatprep.mubr.bf16.mxu0 0
  %398 = vmatmul.mubr.bf16.gmra.mrb[0].mxu0 %v357
  %v399 = vpop.f32.mrb[0].mxu0
  %v400 = vadd.f32 0.0, %v399
  %v401 = vpop.f32.mrb[0].mxu0
  %v402 = vpop.f32.mrb[0].mxu0
  %v403 = vadd.f32 0.0, %v402
  %v404 = vpop.f32.mrb[0].mxu0
  %405 = vmatprep.mubr.bf16.mxu0 0
  %406 = vmatmul.mubr.bf16.gmra.mrb[0].mxu0 %v358
  %v407 = vpop.f32.mrb[0].mxu0
  %v408 = vadd.f32 0.0, %v407
  %v409 = vpop.f32.mrb[0].mxu0
  %v410 = vpop.f32.mrb[0].mxu0
  %v411 = vadd.f32 0.0, %v410
  %v412 = vpop.f32.mrb[0].mxu0
  %413 = vmatprep.mubr.bf16.mxu0 0
  %414 = vmatmul.mubr.bf16.gmra.mrb[0].mxu0 %v359
  %v415 = vpop.f32.mrb[0].mxu0
  %v416 = vadd.f32 0.0, %v415
  %v417 = vpop.f32.mrb[0].mxu0
  %v418 = vpop.f32.mrb[0].mxu0
  %v419 = vadd.f32 0.0, %v418
  %v420 = vpop.f32.mrb[0].mxu0
  %421 = vmatprep.mubr.bf16.mxu0 0
  %422 = vmatmul.mubr.bf16.gmra.mrb[0].mxu0 %v360
  %v423 = vpop.f32.mrb[0].mxu0
  %v424 = vadd.f32 0.0, %v423
  %v425 = vpop.f32.mrb[0].mxu0
  %v426 = vpop.f32.mrb[0].mxu0
  %v427 = vadd.f32 0.0, %v426
  %v428 = vpop.f32.mrb[0].mxu0
  %429 = vdwg.mxu0
  %v430 = vtanh.pop %v400
  %v431 = vtanh.pop %v403
  %v432 = vtanh.pop %v408
  %v433 = vtanh.pop %v411
  %v434 = vxor.u32 %v416, 2147483648
  %v435 = vxor.u32 %v419, 2147483648
  %v436 = vxor.u32 %v424, 2147483648
  %v437 = vxor.u32 %v427, 2147483648
  %v438 = vmul.f32 %v434, 1.442695
  %v439 = vpow.pop %v438
  %v440 = vmul.f32 %v435, 1.442695
  %v441 = vpow.pop %v440
  %v442 = vmul.f32 %v436, 1.442695
  %v443 = vpow.pop %v442
  %v444 = vmul.f32 %v437, 1.442695
  %v445 = vpow.pop %v444
  %v446 = vadd.f32 %v439, 1.0
  %v447 = vadd.f32 %v441, 1.0
  %v448 = vadd.f32 %v443, 1.0
  %v449 = vadd.f32 %v445, 1.0
  %v450 = vrcp.pop %v446
  %v451 = vmul.f32 1.0, %v450
  %v452 = vrcp.pop %v447
  %v453 = vmul.f32 1.0, %v452
  %v454 = vrcp.pop %v448
  %v455 = vmul.f32 1.0, %v454
  %v456 = vrcp.pop %v449
  %v457 = vmul.f32 1.0, %v456
  %v458 = vmul.f32 %v430, %v451
  %v459 = vmul.f32 %v431, %v453
  %v460 = vmul.f32 %v432, %v455
  %v461 = vmul.f32 %v433, %v457
  %v462 = vpack.c.bf16 %v459, %v458
  %v463 = vpack.c.bf16 %v461, %v460
  %v464 = vld [vmem:[%s7] sm:$0xf]
  %v465 = vld [vmem:[%s7 + $0x4] sm:$0xf]
  %v466 = vld [vmem:[%s7 + $0x8] sm:$0xf]
  %v467 = vld [vmem:[%s7 + $0xc] sm:$0xf]
  %v468 = vld [vmem:[%s7 + $0x10] sm:$0xf]
  %v469 = vld [vmem:[%s7 + $0x14] sm:$0xf]
  %v470 = vld [vmem:[%s7 + $0x18] sm:$0xf]
  %v471 = vld [vmem:[%s7 + $0x1c] sm:$0xf]
  %v480 = vunpack.c.l.b16 %v464
  %v481 = vunpack.c.l.b16 %v465
  %v482 = vunpack.c.l.b16 %v466
  %v483 = vunpack.c.l.b16 %v467
  %v484 = vunpack.c.l.b16 %v468
  %v485 = vunpack.c.l.b16 %v469
  %v486 = vunpack.c.l.b16 %v470
  %v487 = vunpack.c.l.b16 %v471
  %v488 = vpack.c.b16 %v481, %v480
  %v489 = vpack.c.b16 %v483, %v482
  %v490 = vpack.c.b16 %v485, %v484
  %v491 = vpack.c.b16 %v487, %v486
  %vm492 = vcmask 523264
  %v494 = vsel %vm492, %v488, 0
  %v497 = vsel %vm492, %v489, 0
  %v500 = vsel %vm492, %v490, 0
  %v503 = vsel %vm492, %v491, 0
  %505 = vmatprep.subr.bf16.mxu0 0
  %506 = vmatpush1.bf16.msra.mxu0 %v462
  %507 = vmatprep.subr.bf16.mxu0 0
  %508 = vmatpush1.bf16.msra.mxu0 %v463
  %509 = vmatprep.subr.bf16.mxu0 0
  %510 = vmatpush1.bf16.msra.mxu0 %v331
  %511 = vmatprep.subr.bf16.mxu0 0
  %512 = vmatpush1.bf16.msra.mxu0 %v332
  %513 = vmatprep.subr.bf16.mxu0 0
  %514 = vmatpush1.bf16.msra.mxu0 0
  %515 = vmatprep.subr.bf16.mxu0 0
  %516 = vmatpush1.bf16.msra.mxu0 0
  %517 = vmatprep.subr.bf16.mxu0 0
  %518 = vmatpush1.bf16.msra.mxu0 0
  %519 = vmatprep.subr.bf16.mxu0 0
  %520 = vmatpush1.bf16.msra.mxu0 0
  %521 = vmatprep.subr.bf16.mxu0 0
  %522 = vmatpush1.bf16.msra.mxu0 0
  %523 = vmatprep.subr.bf16.mxu0 0
  %524 = vmatpush1.bf16.msra.mxu0 0
  %525 = vmatprep.subr.bf16.mxu0 0
  %526 = vmatpush1.bf16.msra.mxu0 0
  %527 = vmatprep.subr.bf16.mxu0 0
  %528 = vmatpush1.bf16.msra.mxu0 0
  %529 = vmatprep.subr.bf16.mxu0 0
  %530 = vmatpush1.bf16.msra.mxu0 0
  %531 = vmatprep.subr.bf16.mxu0 0
  %532 = vmatpush1.bf16.msra.mxu0 0
  %533 = vmatprep.subr.bf16.mxu0 0
  %534 = vmatpush1.bf16.msra.mxu0 0
  %535 = vmatprep.subr.bf16.mxu0 0
  %536 = vmatpush1.bf16.msra.mxu0 0
  %537 = vmatprep.mubr.bf16.mxu0 0
  %538 = vmatmul.mubr.bf16.gmra.mrb[0].mxu0 %v494
  %v539 = vpop.f32.mrb[0].mxu0
  %v540 = vadd.f32 0.0, %v539
  %v541 = vpop.f32.mrb[0].mxu0
  %v542 = vpop.f32.mrb[0].mxu0
  %v543 = vadd.f32 0.0, %v542
  %v544 = vpop.f32.mrb[0].mxu0
  %545 = vmatprep.mubr.bf16.mxu0 0
  %546 = vmatmul.mubr.bf16.gmra.mrb[0].mxu0 %v497
  %v547 = vpop.f32.mrb[0].mxu0
  %v548 = vadd.f32 0.0, %v547
  %v549 = vpop.f32.mrb[0].mxu0
  %v550 = vpop.f32.mrb[0].mxu0
  %v551 = vadd.f32 0.0, %v550
  %v552 = vpop.f32.mrb[0].mxu0
  %553 = vmatprep.mubr.bf16.mxu0 0
  %554 = vmatmul.mubr.bf16.gmra.mrb[0].mxu0 %v500
  %v555 = vpop.f32.mrb[0].mxu0
  %v556 = vadd.f32 0.0, %v555
  %v557 = vpop.f32.mrb[0].mxu0
  %v558 = vpop.f32.mrb[0].mxu0
  %v559 = vadd.f32 0.0, %v558
  %v560 = vpop.f32.mrb[0].mxu0
  %561 = vmatprep.mubr.bf16.mxu0 0
  %562 = vmatmul.mubr.bf16.gmra.mrb[0].mxu0 %v503
  %v563 = vpop.f32.mrb[0].mxu0
  %v564 = vadd.f32 0.0, %v563
  %v565 = vpop.f32.mrb[0].mxu0
  %v566 = vpop.f32.mrb[0].mxu0
  %v567 = vadd.f32 0.0, %v566
  %v568 = vpop.f32.mrb[0].mxu0
  %569 = vdwg.mxu0
  %v570 = vadd.f32 %v540, %v263
  %v571 = vadd.f32 %v543, %v264
  %v572 = vadd.f32 %v548, %v265
  %v573 = vadd.f32 %v551, %v266
  %v574 = vmul.f32 %v570, 0.70710677
  %v575 = vmul.f32 %v571, 0.70710677
  %v576 = vmul.f32 %v572, 0.70710677
  %v577 = vmul.f32 %v573, 0.70710677
  %v578 = vadd.f32 %v556, 0.0
  %v579 = vadd.f32 %v559, 0.0
  %v580 = vadd.f32 %v564, 0.0
  %v581 = vadd.f32 %v567, 0.0
  %582 = vrot.lane.b32.xlu0 %v574, 2
  %v583 = vpop.permute.xlu0 %582
  %584 = vrot.lane.b32.xlu0 %v575, 2
  %v585 = vpop.permute.xlu0 %584
  %586 = vrot.lane.b32.xlu0 %v576, 2
  %v587 = vpop.permute.xlu0 %586
  %588 = vrot.lane.b32.xlu0 %v577, 2
  %v589 = vpop.permute.xlu0 %588
  %v590 = vsel %vm284, 1, 0
  %vm591 = vcmp.eq.s32.totalorder %v590, 1
  %v592 = vsel %vm591, %v583, 0.0
  %v593 = vsel %vm591, %v585, 0.0
  %v594 = vsel %vm591, %v587, 0.0
  %v595 = vsel %vm591, %v589, 0.0
  %596 = vrot.lane.b32.xlu0 %v574, 126
  %v597 = vpop.permute.xlu0 %596
  %598 = vrot.lane.b32.xlu0 %v575, 126
  %v599 = vpop.permute.xlu0 %598
  %600 = vrot.lane.b32.xlu0 %v576, 126
  %v601 = vpop.permute.xlu0 %600
  %602 = vrot.lane.b32.xlu0 %v577, 126
  %v603 = vpop.permute.xlu0 %602
  %v604 = vsel %vm296, 1, 0
  %vm605 = vcmp.eq.s32.totalorder %v604, 1
  %v606 = vsel %vm605, %v597, 0.0
  %v607 = vsel %vm605, %v599, 0.0
  %v608 = vsel %vm605, %v601, 0.0
  %v609 = vsel %vm605, %v603, 0.0
  %v610 = vpack.c.bf16 %v593, %v592
  %v611 = vpack.c.bf16 %v595, %v594
  %v612 = vpack.c.bf16 %v575, %v574
  %v613 = vpack.c.bf16 %v577, %v576
  %v614 = vpack.c.bf16 %v607, %v606
  %v615 = vpack.c.bf16 %v609, %v608
  %v616 = vld [vmem:[%s6 + $0x20] sm:$0xf]
  %v617 = vld [vmem:[%s6 + $0x24] sm:$0xf]
  %v618 = vld [vmem:[%s6 + $0x28] sm:$0xf]
  %v619 = vld [vmem:[%s6 + $0x2c] sm:$0xf]
  %v620 = vld [vmem:[%s6 + $0x30] sm:$0xf]
  %v621 = vld [vmem:[%s6 + $0x34] sm:$0xf]
  %v622 = vld [vmem:[%s6 + $0x38] sm:$0xf]
  %v623 = vld [vmem:[%s6 + $0x3c] sm:$0xf]
  %v632 = vunpack.c.l.b16 %v616
  %v633 = vunpack.c.l.b16 %v617
  %v634 = vunpack.c.l.b16 %v618
  %v635 = vunpack.c.l.b16 %v619
  %v636 = vunpack.c.l.b16 %v620
  %v637 = vunpack.c.l.b16 %v621
  %v638 = vunpack.c.l.b16 %v622
  %v639 = vunpack.c.l.b16 %v623
  %v640 = vpack.c.b16 %v633, %v632
  %v641 = vpack.c.b16 %v635, %v634
  %v642 = vpack.c.b16 %v637, %v636
  %v643 = vpack.c.b16 %v639, %v638
  %648 = vmatprep.subr.bf16.mxu0 0
  %649 = vmatpush1.bf16.msra.mxu0 %v610
  %650 = vmatprep.subr.bf16.mxu0 0
  %651 = vmatpush1.bf16.msra.mxu0 %v611
  %652 = vmatprep.subr.bf16.mxu0 0
  %653 = vmatpush1.bf16.msra.mxu0 %v612
  %654 = vmatprep.subr.bf16.mxu0 0
  %655 = vmatpush1.bf16.msra.mxu0 %v613
  %656 = vmatprep.subr.bf16.mxu0 0
  %657 = vmatpush1.bf16.msra.mxu0 %v614
  %658 = vmatprep.subr.bf16.mxu0 0
  %659 = vmatpush1.bf16.msra.mxu0 %v615
  %660 = vmatprep.subr.bf16.mxu0 0
  %661 = vmatpush1.bf16.msra.mxu0 %v331
  %662 = vmatprep.subr.bf16.mxu0 0
  %663 = vmatpush1.bf16.msra.mxu0 %v332
  %664 = vmatprep.subr.bf16.mxu0 0
  %665 = vmatpush1.bf16.msra.mxu0 0
  %666 = vmatprep.subr.bf16.mxu0 0
  %667 = vmatpush1.bf16.msra.mxu0 0
  %668 = vmatprep.subr.bf16.mxu0 0
  %669 = vmatpush1.bf16.msra.mxu0 0
  %670 = vmatprep.subr.bf16.mxu0 0
  %671 = vmatpush1.bf16.msra.mxu0 0
  %672 = vmatprep.subr.bf16.mxu0 0
  %673 = vmatpush1.bf16.msra.mxu0 0
  %674 = vmatprep.subr.bf16.mxu0 0
  %675 = vmatpush1.bf16.msra.mxu0 0
  %676 = vmatprep.subr.bf16.mxu0 0
  %677 = vmatpush1.bf16.msra.mxu0 0
  %678 = vmatprep.subr.bf16.mxu0 0
  %679 = vmatpush1.bf16.msra.mxu0 0
  %680 = vmatprep.mubr.bf16.mxu0 0
  %681 = vmatmul.mubr.bf16.gmra.mrb[0].mxu0 %v640
  %v682 = vpop.f32.mrb[0].mxu0
  %v683 = vadd.f32 0.0, %v682
  %v684 = vpop.f32.mrb[0].mxu0
  %v685 = vpop.f32.mrb[0].mxu0
  %v686 = vadd.f32 0.0, %v685
  %v687 = vpop.f32.mrb[0].mxu0
  %688 = vmatprep.mubr.bf16.mxu0 0
  %689 = vmatmul.mubr.bf16.gmra.mrb[0].mxu0 %v641
  %v690 = vpop.f32.mrb[0].mxu0
  %v691 = vadd.f32 0.0, %v690
  %v692 = vpop.f32.mrb[0].mxu0
  %v693 = vpop.f32.mrb[0].mxu0
  %v694 = vadd.f32 0.0, %v693
  %v695 = vpop.f32.mrb[0].mxu0
  %696 = vmatprep.mubr.bf16.mxu0 0
  %697 = vmatmul.mubr.bf16.gmra.mrb[0].mxu0 %v642
  %v698 = vpop.f32.mrb[0].mxu0
  %v699 = vadd.f32 0.0, %v698
  %v700 = vpop.f32.mrb[0].mxu0
  %v701 = vpop.f32.mrb[0].mxu0
  %v702 = vadd.f32 0.0, %v701
  %v703 = vpop.f32.mrb[0].mxu0
  %704 = vmatprep.mubr.bf16.mxu0 0
  %705 = vmatmul.mubr.bf16.gmra.mrb[0].mxu0 %v643
  %v706 = vpop.f32.mrb[0].mxu0
  %v707 = vadd.f32 0.0, %v706
  %v708 = vpop.f32.mrb[0].mxu0
  %v709 = vpop.f32.mrb[0].mxu0
  %v710 = vadd.f32 0.0, %v709
  %v711 = vpop.f32.mrb[0].mxu0
  %712 = vdwg.mxu0
  %v713 = vtanh.pop %v683
  %v714 = vtanh.pop %v686
  %v715 = vtanh.pop %v691
  %v716 = vtanh.pop %v694
  %v717 = vxor.u32 %v699, 2147483648
  %v718 = vxor.u32 %v702, 2147483648
  %v719 = vxor.u32 %v707, 2147483648
  %v720 = vxor.u32 %v710, 2147483648
  %v721 = vmul.f32 %v717, 1.442695
  %v722 = vpow.pop %v721
  %v723 = vmul.f32 %v718, 1.442695
  %v724 = vpow.pop %v723
  %v725 = vmul.f32 %v719, 1.442695
  %v726 = vpow.pop %v725
  %v727 = vmul.f32 %v720, 1.442695
  %v728 = vpow.pop %v727
  %v729 = vadd.f32 %v722, 1.0
  %v730 = vadd.f32 %v724, 1.0
  %v731 = vadd.f32 %v726, 1.0
  %v732 = vadd.f32 %v728, 1.0
  %v733 = vrcp.pop %v729
  %v734 = vmul.f32 1.0, %v733
  %v735 = vrcp.pop %v730
  %v736 = vmul.f32 1.0, %v735
  %v737 = vrcp.pop %v731
  %v738 = vmul.f32 1.0, %v737
  %v739 = vrcp.pop %v732
  %v740 = vmul.f32 1.0, %v739
  %v741 = vmul.f32 %v713, %v734
  %v742 = vmul.f32 %v714, %v736
  %v743 = vmul.f32 %v715, %v738
  %v744 = vmul.f32 %v716, %v740
  %v745 = vpack.c.bf16 %v742, %v741
  %v746 = vpack.c.bf16 %v744, %v743
  %v747 = vld [vmem:[%s7 + $0x20] sm:$0xf]
  %v748 = vld [vmem:[%s7 + $0x24] sm:$0xf]
  %v749 = vld [vmem:[%s7 + $0x28] sm:$0xf]
  %v750 = vld [vmem:[%s7 + $0x2c] sm:$0xf]
  %v751 = vld [vmem:[%s7 + $0x30] sm:$0xf]
  %v752 = vld [vmem:[%s7 + $0x34] sm:$0xf]
  %v753 = vld [vmem:[%s7 + $0x38] sm:$0xf]
  %v754 = vld [vmem:[%s7 + $0x3c] sm:$0xf]
  %v763 = vunpack.c.l.b16 %v747
  %v764 = vunpack.c.l.b16 %v748
  %v765 = vunpack.c.l.b16 %v749
  %v766 = vunpack.c.l.b16 %v750
  %v767 = vunpack.c.l.b16 %v751
  %v768 = vunpack.c.l.b16 %v752
  %v769 = vunpack.c.l.b16 %v753
  %v770 = vunpack.c.l.b16 %v754
  %v771 = vpack.c.b16 %v764, %v763
  %v772 = vpack.c.b16 %v766, %v765
  %v773 = vpack.c.b16 %v768, %v767
  %v774 = vpack.c.b16 %v770, %v769
  %v776 = vsel %vm492, %v771, 0
  %v779 = vsel %vm492, %v772, 0
  %v782 = vsel %vm492, %v773, 0
  %v785 = vsel %vm492, %v774, 0
  %787 = vmatprep.subr.bf16.mxu0 0
  %788 = vmatpush1.bf16.msra.mxu0 %v745
  %789 = vmatprep.subr.bf16.mxu0 0
  %790 = vmatpush1.bf16.msra.mxu0 %v746
  %791 = vmatprep.subr.bf16.mxu0 0
  %792 = vmatpush1.bf16.msra.mxu0 %v331
  %793 = vmatprep.subr.bf16.mxu0 0
  %794 = vmatpush1.bf16.msra.mxu0 %v332
  %795 = vmatprep.subr.bf16.mxu0 0
  %796 = vmatpush1.bf16.msra.mxu0 0
  %797 = vmatprep.subr.bf16.mxu0 0
  %798 = vmatpush1.bf16.msra.mxu0 0
  %799 = vmatprep.subr.bf16.mxu0 0
  %800 = vmatpush1.bf16.msra.mxu0 0
  %801 = vmatprep.subr.bf16.mxu0 0
  %802 = vmatpush1.bf16.msra.mxu0 0
  %803 = vmatprep.subr.bf16.mxu0 0
  %804 = vmatpush1.bf16.msra.mxu0 0
  %805 = vmatprep.subr.bf16.mxu0 0
  %806 = vmatpush1.bf16.msra.mxu0 0
  %807 = vmatprep.subr.bf16.mxu0 0
  %808 = vmatpush1.bf16.msra.mxu0 0
  %809 = vmatprep.subr.bf16.mxu0 0
  %810 = vmatpush1.bf16.msra.mxu0 0
  %811 = vmatprep.subr.bf16.mxu0 0
  %812 = vmatpush1.bf16.msra.mxu0 0
  %813 = vmatprep.subr.bf16.mxu0 0
  %814 = vmatpush1.bf16.msra.mxu0 0
  %815 = vmatprep.subr.bf16.mxu0 0
  %816 = vmatpush1.bf16.msra.mxu0 0
  %817 = vmatprep.subr.bf16.mxu0 0
  %818 = vmatpush1.bf16.msra.mxu0 0
  %819 = vmatprep.mubr.bf16.mxu0 0
  %820 = vmatmul.mubr.bf16.gmra.mrb[0].mxu0 %v776
  %v821 = vpop.f32.mrb[0].mxu0
  %v822 = vadd.f32 0.0, %v821
  %v823 = vpop.f32.mrb[0].mxu0
  %v824 = vpop.f32.mrb[0].mxu0
  %v825 = vadd.f32 0.0, %v824
  %v826 = vpop.f32.mrb[0].mxu0
  %827 = vmatprep.mubr.bf16.mxu0 0
  %828 = vmatmul.mubr.bf16.gmra.mrb[0].mxu0 %v779
  %v829 = vpop.f32.mrb[0].mxu0
  %v830 = vadd.f32 0.0, %v829
  %v831 = vpop.f32.mrb[0].mxu0
  %v832 = vpop.f32.mrb[0].mxu0
  %v833 = vadd.f32 0.0, %v832
  %v834 = vpop.f32.mrb[0].mxu0
  %835 = vmatprep.mubr.bf16.mxu0 0
  %836 = vmatmul.mubr.bf16.gmra.mrb[0].mxu0 %v782
  %v837 = vpop.f32.mrb[0].mxu0
  %v838 = vadd.f32 0.0, %v837
  %v839 = vpop.f32.mrb[0].mxu0
  %v840 = vpop.f32.mrb[0].mxu0
  %v841 = vadd.f32 0.0, %v840
  %v842 = vpop.f32.mrb[0].mxu0
  %843 = vmatprep.mubr.bf16.mxu0 0
  %844 = vmatmul.mubr.bf16.gmra.mrb[0].mxu0 %v785
  %v845 = vpop.f32.mrb[0].mxu0
  %v846 = vadd.f32 0.0, %v845
  %v847 = vpop.f32.mrb[0].mxu0
  %v848 = vpop.f32.mrb[0].mxu0
  %v849 = vadd.f32 0.0, %v848
  %v850 = vpop.f32.mrb[0].mxu0
  %851 = vdwg.mxu0
  %v852 = vadd.f32 %v822, %v574
  %v853 = vadd.f32 %v825, %v575
  %v854 = vadd.f32 %v830, %v576
  %v855 = vadd.f32 %v833, %v577
  %v856 = vmul.f32 %v852, 0.70710677
  %v857 = vmul.f32 %v853, 0.70710677
  %v858 = vmul.f32 %v854, 0.70710677
  %v859 = vmul.f32 %v855, 0.70710677
  %v860 = vadd.f32 %v578, %v838
  %v861 = vadd.f32 %v579, %v841
  %v862 = vadd.f32 %v580, %v846
  %v863 = vadd.f32 %v581, %v849
  %864 = vrot.lane.b32.xlu0 %v856, 1
  %v865 = vpop.permute.xlu0 %864
  %866 = vrot.lane.b32.xlu0 %v857, 1
  %v867 = vpop.permute.xlu0 %866
  %868 = vrot.lane.b32.xlu0 %v858, 1
  %v869 = vpop.permute.xlu0 %868
  %870 = vrot.lane.b32.xlu0 %v859, 1
  %v871 = vpop.permute.xlu0 %870
  %v872 = vsel %vm306, %v865, 0.0
  %v873 = vsel %vm306, %v867, 0.0
  %v874 = vsel %vm306, %v869, 0.0
  %v875 = vsel %vm306, %v871, 0.0
  %876 = vrot.lane.b32.xlu0 %v856, 127
  %v877 = vpop.permute.xlu0 %876
  %878 = vrot.lane.b32.xlu0 %v857, 127
  %v879 = vpop.permute.xlu0 %878
  %880 = vrot.lane.b32.xlu0 %v858, 127
  %v881 = vpop.permute.xlu0 %880
  %882 = vrot.lane.b32.xlu0 %v859, 127
  %v883 = vpop.permute.xlu0 %882
  %v884 = vsel %vm320, %v877, 0.0
  %v885 = vsel %vm320, %v879, 0.0
  %v886 = vsel %vm320, %v881, 0.0
  %v887 = vsel %vm320, %v883, 0.0
  %v888 = vpack.c.bf16 %v873, %v872
  %v889 = vpack.c.bf16 %v875, %v874
  %v890 = vpack.c.bf16 %v857, %v856
  %v891 = vpack.c.bf16 %v859, %v858
  %v892 = vpack.c.bf16 %v885, %v884
  %v893 = vpack.c.bf16 %v887, %v886
  %v894 = vld [vmem:[%s6 + $0x40] sm:$0xf]
  %v895 = vld [vmem:[%s6 + $0x44] sm:$0xf]
  %v896 = vld [vmem:[%s6 + $0x48] sm:$0xf]
  %v897 = vld [vmem:[%s6 + $0x4c] sm:$0xf]
  %v898 = vld [vmem:[%s6 + $0x50] sm:$0xf]
  %v899 = vld [vmem:[%s6 + $0x54] sm:$0xf]
  %v900 = vld [vmem:[%s6 + $0x58] sm:$0xf]
  %v901 = vld [vmem:[%s6 + $0x5c] sm:$0xf]
  %v910 = vunpack.c.l.b16 %v894
  %v911 = vunpack.c.l.b16 %v895
  %v912 = vunpack.c.l.b16 %v896
  %v913 = vunpack.c.l.b16 %v897
  %v914 = vunpack.c.l.b16 %v898
  %v915 = vunpack.c.l.b16 %v899
  %v916 = vunpack.c.l.b16 %v900
  %v917 = vunpack.c.l.b16 %v901
  %v918 = vpack.c.b16 %v911, %v910
  %v919 = vpack.c.b16 %v913, %v912
  %v920 = vpack.c.b16 %v915, %v914
  %v921 = vpack.c.b16 %v917, %v916
  %926 = vmatprep.subr.bf16.mxu0 0
  %927 = vmatpush1.bf16.msra.mxu0 %v888
  %928 = vmatprep.subr.bf16.mxu0 0
  %929 = vmatpush1.bf16.msra.mxu0 %v889
  %930 = vmatprep.subr.bf16.mxu0 0
  %931 = vmatpush1.bf16.msra.mxu0 %v890
  %932 = vmatprep.subr.bf16.mxu0 0
  %933 = vmatpush1.bf16.msra.mxu0 %v891
  %934 = vmatprep.subr.bf16.mxu0 0
  %935 = vmatpush1.bf16.msra.mxu0 %v892
  %936 = vmatprep.subr.bf16.mxu0 0
  %937 = vmatpush1.bf16.msra.mxu0 %v893
  %938 = vmatprep.subr.bf16.mxu0 0
  %939 = vmatpush1.bf16.msra.mxu0 %v331
  %940 = vmatprep.subr.bf16.mxu0 0
  %941 = vmatpush1.bf16.msra.mxu0 %v332
  %942 = vmatprep.subr.bf16.mxu0 0
  %943 = vmatpush1.bf16.msra.mxu0 0
  %944 = vmatprep.subr.bf16.mxu0 0
  %945 = vmatpush1.bf16.msra.mxu0 0
  %946 = vmatprep.subr.bf16.mxu0 0
  %947 = vmatpush1.bf16.msra.mxu0 0
  %948 = vmatprep.subr.bf16.mxu0 0
  %949 = vmatpush1.bf16.msra.mxu0 0
  %950 = vmatprep.subr.bf16.mxu0 0
  %951 = vmatpush1.bf16.msra.mxu0 0
  %952 = vmatprep.subr.bf16.mxu0 0
  %953 = vmatpush1.bf16.msra.mxu0 0
  %954 = vmatprep.subr.bf16.mxu0 0
  %955 = vmatpush1.bf16.msra.mxu0 0
  %956 = vmatprep.subr.bf16.mxu0 0
  %957 = vmatpush1.bf16.msra.mxu0 0
  %958 = vmatprep.mubr.bf16.mxu0 0
  %959 = vmatmul.mubr.bf16.gmra.mrb[0].mxu0 %v918
  %v960 = vpop.f32.mrb[0].mxu0
  %v961 = vadd.f32 0.0, %v960
  %v962 = vpop.f32.mrb[0].mxu0
  %v963 = vpop.f32.mrb[0].mxu0
  %v964 = vadd.f32 0.0, %v963
  %v965 = vpop.f32.mrb[0].mxu0
  %966 = vmatprep.mubr.bf16.mxu0 0
  %967 = vmatmul.mubr.bf16.gmra.mrb[0].mxu0 %v919
  %v968 = vpop.f32.mrb[0].mxu0
  %v969 = vadd.f32 0.0, %v968
  %v970 = vpop.f32.mrb[0].mxu0
  %v971 = vpop.f32.mrb[0].mxu0
  %v972 = vadd.f32 0.0, %v971
  %v973 = vpop.f32.mrb[0].mxu0
  %974 = vmatprep.mubr.bf16.mxu0 0
  %975 = vmatmul.mubr.bf16.gmra.mrb[0].mxu0 %v920
  %v976 = vpop.f32.mrb[0].mxu0
  %v977 = vadd.f32 0.0, %v976
  %v978 = vpop.f32.mrb[0].mxu0
  %v979 = vpop.f32.mrb[0].mxu0
  %v980 = vadd.f32 0.0, %v979
  %v981 = vpop.f32.mrb[0].mxu0
  %982 = vmatprep.mubr.bf16.mxu0 0
  %983 = vmatmul.mubr.bf16.gmra.mrb[0].mxu0 %v921
  %v984 = vpop.f32.mrb[0].mxu0
  %v985 = vadd.f32 0.0, %v984
  %v986 = vpop.f32.mrb[0].mxu0
  %v987 = vpop.f32.mrb[0].mxu0
  %v988 = vadd.f32 0.0, %v987
  %v989 = vpop.f32.mrb[0].mxu0
  %990 = vdwg.mxu0
  %v991 = vtanh.pop %v961
  %v992 = vtanh.pop %v964
  %v993 = vtanh.pop %v969
  %v994 = vtanh.pop %v972
  %v995 = vxor.u32 %v977, 2147483648
  %v996 = vxor.u32 %v980, 2147483648
  %v997 = vxor.u32 %v985, 2147483648
  %v998 = vxor.u32 %v988, 2147483648
  %v999 = vmul.f32 %v995, 1.442695
  %v1000 = vpow.pop %v999
  %v1001 = vmul.f32 %v996, 1.442695
  %v1002 = vpow.pop %v1001
  %v1003 = vmul.f32 %v997, 1.442695
  %v1004 = vpow.pop %v1003
  %v1005 = vmul.f32 %v998, 1.442695
  %v1006 = vpow.pop %v1005
  %v1007 = vadd.f32 %v1000, 1.0
  %v1008 = vadd.f32 %v1002, 1.0
  %v1009 = vadd.f32 %v1004, 1.0
  %v1010 = vadd.f32 %v1006, 1.0
  %v1011 = vrcp.pop %v1007
  %v1012 = vmul.f32 1.0, %v1011
  %v1013 = vrcp.pop %v1008
  %v1014 = vmul.f32 1.0, %v1013
  %v1015 = vrcp.pop %v1009
  %v1016 = vmul.f32 1.0, %v1015
  %v1017 = vrcp.pop %v1010
  %v1018 = vmul.f32 1.0, %v1017
  %v1019 = vmul.f32 %v991, %v1012
  %v1020 = vmul.f32 %v992, %v1014
  %v1021 = vmul.f32 %v993, %v1016
  %v1022 = vmul.f32 %v994, %v1018
  %v1023 = vpack.c.bf16 %v1020, %v1019
  %v1024 = vpack.c.bf16 %v1022, %v1021
  %v1025 = vld [vmem:[%s7 + $0x40] sm:$0xf]
  %v1026 = vld [vmem:[%s7 + $0x44] sm:$0xf]
  %v1027 = vld [vmem:[%s7 + $0x48] sm:$0xf]
  %v1028 = vld [vmem:[%s7 + $0x4c] sm:$0xf]
  %v1029 = vld [vmem:[%s7 + $0x50] sm:$0xf]
  %v1030 = vld [vmem:[%s7 + $0x54] sm:$0xf]
  %v1031 = vld [vmem:[%s7 + $0x58] sm:$0xf]
  %v1032 = vld [vmem:[%s7 + $0x5c] sm:$0xf]
  %v1041 = vunpack.c.l.b16 %v1025
  %v1042 = vunpack.c.l.b16 %v1026
  %v1043 = vunpack.c.l.b16 %v1027
  %v1044 = vunpack.c.l.b16 %v1028
  %v1045 = vunpack.c.l.b16 %v1029
  %v1046 = vunpack.c.l.b16 %v1030
  %v1047 = vunpack.c.l.b16 %v1031
  %v1048 = vunpack.c.l.b16 %v1032
  %v1049 = vpack.c.b16 %v1042, %v1041
  %v1050 = vpack.c.b16 %v1044, %v1043
  %v1051 = vpack.c.b16 %v1046, %v1045
  %v1052 = vpack.c.b16 %v1048, %v1047
  %v1054 = vsel %vm492, %v1049, 0
  %v1057 = vsel %vm492, %v1050, 0
  %v1060 = vsel %vm492, %v1051, 0
  %v1063 = vsel %vm492, %v1052, 0
  %1065 = vmatprep.subr.bf16.mxu0 0
  %1066 = vmatpush1.bf16.msra.mxu0 %v1023
  %1067 = vmatprep.subr.bf16.mxu0 0
  %1068 = vmatpush1.bf16.msra.mxu0 %v1024
  %1069 = vmatprep.subr.bf16.mxu0 0
  %1070 = vmatpush1.bf16.msra.mxu0 %v331
  %1071 = vmatprep.subr.bf16.mxu0 0
  %1072 = vmatpush1.bf16.msra.mxu0 %v332
  %1073 = vmatprep.subr.bf16.mxu0 0
  %1074 = vmatpush1.bf16.msra.mxu0 0
  %1075 = vmatprep.subr.bf16.mxu0 0
  %1076 = vmatpush1.bf16.msra.mxu0 0
  %1077 = vmatprep.subr.bf16.mxu0 0
  %1078 = vmatpush1.bf16.msra.mxu0 0
  %1079 = vmatprep.subr.bf16.mxu0 0
  %1080 = vmatpush1.bf16.msra.mxu0 0
  %1081 = vmatprep.subr.bf16.mxu0 0
  %1082 = vmatpush1.bf16.msra.mxu0 0
  %1083 = vmatprep.subr.bf16.mxu0 0
  %1084 = vmatpush1.bf16.msra.mxu0 0
  %1085 = vmatprep.subr.bf16.mxu0 0
  %1086 = vmatpush1.bf16.msra.mxu0 0
  %1087 = vmatprep.subr.bf16.mxu0 0
  %1088 = vmatpush1.bf16.msra.mxu0 0
  %1089 = vmatprep.subr.bf16.mxu0 0
  %1090 = vmatpush1.bf16.msra.mxu0 0
  %1091 = vmatprep.subr.bf16.mxu0 0
  %1092 = vmatpush1.bf16.msra.mxu0 0
  %1093 = vmatprep.subr.bf16.mxu0 0
  %1094 = vmatpush1.bf16.msra.mxu0 0
  %1095 = vmatprep.subr.bf16.mxu0 0
  %1096 = vmatpush1.bf16.msra.mxu0 0
  %1097 = vmatprep.mubr.bf16.mxu0 0
  %1098 = vmatmul.mubr.bf16.gmra.mrb[0].mxu0 %v1054
  %v1099 = vpop.f32.mrb[0].mxu0
  %v1100 = vadd.f32 0.0, %v1099
  %v1101 = vpop.f32.mrb[0].mxu0
  %v1102 = vpop.f32.mrb[0].mxu0
  %v1103 = vadd.f32 0.0, %v1102
  %v1104 = vpop.f32.mrb[0].mxu0
  %1105 = vmatprep.mubr.bf16.mxu0 0
  %1106 = vmatmul.mubr.bf16.gmra.mrb[0].mxu0 %v1057
  %v1107 = vpop.f32.mrb[0].mxu0
  %v1108 = vadd.f32 0.0, %v1107
  %v1109 = vpop.f32.mrb[0].mxu0
  %v1110 = vpop.f32.mrb[0].mxu0
  %v1111 = vadd.f32 0.0, %v1110
  %v1112 = vpop.f32.mrb[0].mxu0
  %1113 = vmatprep.mubr.bf16.mxu0 0
  %1114 = vmatmul.mubr.bf16.gmra.mrb[0].mxu0 %v1060
  %v1115 = vpop.f32.mrb[0].mxu0
  %v1116 = vadd.f32 0.0, %v1115
  %v1117 = vpop.f32.mrb[0].mxu0
  %v1118 = vpop.f32.mrb[0].mxu0
  %v1119 = vadd.f32 0.0, %v1118
  %v1120 = vpop.f32.mrb[0].mxu0
  %1121 = vmatprep.mubr.bf16.mxu0 0
  %1122 = vmatmul.mubr.bf16.gmra.mrb[0].mxu0 %v1063
  %v1123 = vpop.f32.mrb[0].mxu0
  %v1124 = vadd.f32 0.0, %v1123
  %v1125 = vpop.f32.mrb[0].mxu0
  %v1126 = vpop.f32.mrb[0].mxu0
  %v1127 = vadd.f32 0.0, %v1126
  %v1128 = vpop.f32.mrb[0].mxu0
  %1129 = vdwg.mxu0
  %v1130 = vadd.f32 %v1100, %v856
  %v1131 = vadd.f32 %v1103, %v857
  %v1132 = vadd.f32 %v1108, %v858
  %v1133 = vadd.f32 %v1111, %v859
  %v1134 = vmul.f32 %v1130, 0.70710677
  %v1135 = vmul.f32 %v1131, 0.70710677
  %v1136 = vmul.f32 %v1132, 0.70710677
  %v1137 = vmul.f32 %v1133, 0.70710677
  %v1138 = vadd.f32 %v860, %v1116
  %v1139 = vadd.f32 %v861, %v1119
  %v1140 = vadd.f32 %v862, %v1124
  %v1141 = vadd.f32 %v863, %v1127
  %1142 = vrot.lane.b32.xlu0 %v1134, 2
  %v1143 = vpop.permute.xlu0 %1142
  %1144 = vrot.lane.b32.xlu0 %v1135, 2
  %v1145 = vpop.permute.xlu0 %1144
  %1146 = vrot.lane.b32.xlu0 %v1136, 2
  %v1147 = vpop.permute.xlu0 %1146
  %1148 = vrot.lane.b32.xlu0 %v1137, 2
  %v1149 = vpop.permute.xlu0 %1148
  %v1150 = vsel %vm591, %v1143, 0.0
  %v1151 = vsel %vm591, %v1145, 0.0
  %v1152 = vsel %vm591, %v1147, 0.0
  %v1153 = vsel %vm591, %v1149, 0.0
  %1154 = vrot.lane.b32.xlu0 %v1134, 126
  %v1155 = vpop.permute.xlu0 %1154
  %1156 = vrot.lane.b32.xlu0 %v1135, 126
  %v1157 = vpop.permute.xlu0 %1156
  %1158 = vrot.lane.b32.xlu0 %v1136, 126
  %v1159 = vpop.permute.xlu0 %1158
  %1160 = vrot.lane.b32.xlu0 %v1137, 126
  %v1161 = vpop.permute.xlu0 %1160
  %v1162 = vsel %vm605, %v1155, 0.0
  %v1163 = vsel %vm605, %v1157, 0.0
  %v1164 = vsel %vm605, %v1159, 0.0
  %v1165 = vsel %vm605, %v1161, 0.0
  %v1166 = vpack.c.bf16 %v1151, %v1150
  %v1167 = vpack.c.bf16 %v1153, %v1152
  %v1168 = vpack.c.bf16 %v1135, %v1134
  %v1169 = vpack.c.bf16 %v1137, %v1136
  %v1170 = vpack.c.bf16 %v1163, %v1162
  %v1171 = vpack.c.bf16 %v1165, %v1164
  %v1172 = vld [vmem:[%s6 + $0x60] sm:$0xf]
  %v1173 = vld [vmem:[%s6 + $0x64] sm:$0xf]
  %v1174 = vld [vmem:[%s6 + $0x68] sm:$0xf]
  %v1175 = vld [vmem:[%s6 + $0x6c] sm:$0xf]
  %v1176 = vld [vmem:[%s6 + $0x70] sm:$0xf]
  %v1177 = vld [vmem:[%s6 + $0x74] sm:$0xf]
  %v1178 = vld [vmem:[%s6 + $0x78] sm:$0xf]
  %v1179 = vld [vmem:[%s6 + $0x7c] sm:$0xf]
  %v1188 = vunpack.c.l.b16 %v1172
  %v1189 = vunpack.c.l.b16 %v1173
  %v1190 = vunpack.c.l.b16 %v1174
  %v1191 = vunpack.c.l.b16 %v1175
  %v1192 = vunpack.c.l.b16 %v1176
  %v1193 = vunpack.c.l.b16 %v1177
  %v1194 = vunpack.c.l.b16 %v1178
  %v1195 = vunpack.c.l.b16 %v1179
  %v1196 = vpack.c.b16 %v1189, %v1188
  %v1197 = vpack.c.b16 %v1191, %v1190
  %v1198 = vpack.c.b16 %v1193, %v1192
  %v1199 = vpack.c.b16 %v1195, %v1194
  %1204 = vmatprep.subr.bf16.mxu0 0
  %1205 = vmatpush1.bf16.msra.mxu0 %v1166
  %1206 = vmatprep.subr.bf16.mxu0 0
  %1207 = vmatpush1.bf16.msra.mxu0 %v1167
  %1208 = vmatprep.subr.bf16.mxu0 0
  %1209 = vmatpush1.bf16.msra.mxu0 %v1168
  %1210 = vmatprep.subr.bf16.mxu0 0
  %1211 = vmatpush1.bf16.msra.mxu0 %v1169
  %1212 = vmatprep.subr.bf16.mxu0 0
  %1213 = vmatpush1.bf16.msra.mxu0 %v1170
  %1214 = vmatprep.subr.bf16.mxu0 0
  %1215 = vmatpush1.bf16.msra.mxu0 %v1171
  %1216 = vmatprep.subr.bf16.mxu0 0
  %1217 = vmatpush1.bf16.msra.mxu0 %v331
  %1218 = vmatprep.subr.bf16.mxu0 0
  %1219 = vmatpush1.bf16.msra.mxu0 %v332
  %1220 = vmatprep.subr.bf16.mxu0 0
  %1221 = vmatpush1.bf16.msra.mxu0 0
  %1222 = vmatprep.subr.bf16.mxu0 0
  %1223 = vmatpush1.bf16.msra.mxu0 0
  %1224 = vmatprep.subr.bf16.mxu0 0
  %1225 = vmatpush1.bf16.msra.mxu0 0
  %1226 = vmatprep.subr.bf16.mxu0 0
  %1227 = vmatpush1.bf16.msra.mxu0 0
  %1228 = vmatprep.subr.bf16.mxu0 0
  %1229 = vmatpush1.bf16.msra.mxu0 0
  %1230 = vmatprep.subr.bf16.mxu0 0
  %1231 = vmatpush1.bf16.msra.mxu0 0
  %1232 = vmatprep.subr.bf16.mxu0 0
  %1233 = vmatpush1.bf16.msra.mxu0 0
  %1234 = vmatprep.subr.bf16.mxu0 0
  %1235 = vmatpush1.bf16.msra.mxu0 0
  %1236 = vmatprep.mubr.bf16.mxu0 0
  %1237 = vmatmul.mubr.bf16.gmra.mrb[0].mxu0 %v1196
  %v1238 = vpop.f32.mrb[0].mxu0
  %v1239 = vadd.f32 0.0, %v1238
  %v1240 = vpop.f32.mrb[0].mxu0
  %v1241 = vpop.f32.mrb[0].mxu0
  %v1242 = vadd.f32 0.0, %v1241
  %v1243 = vpop.f32.mrb[0].mxu0
  %1244 = vmatprep.mubr.bf16.mxu0 0
  %1245 = vmatmul.mubr.bf16.gmra.mrb[0].mxu0 %v1197
  %v1246 = vpop.f32.mrb[0].mxu0
  %v1247 = vadd.f32 0.0, %v1246
  %v1248 = vpop.f32.mrb[0].mxu0
  %v1249 = vpop.f32.mrb[0].mxu0
  %v1250 = vadd.f32 0.0, %v1249
  %v1251 = vpop.f32.mrb[0].mxu0
  %1252 = vmatprep.mubr.bf16.mxu0 0
  %1253 = vmatmul.mubr.bf16.gmra.mrb[0].mxu0 %v1198
  %v1254 = vpop.f32.mrb[0].mxu0
  %v1255 = vadd.f32 0.0, %v1254
  %v1256 = vpop.f32.mrb[0].mxu0
  %v1257 = vpop.f32.mrb[0].mxu0
  %v1258 = vadd.f32 0.0, %v1257
  %v1259 = vpop.f32.mrb[0].mxu0
  %1260 = vmatprep.mubr.bf16.mxu0 0
  %1261 = vmatmul.mubr.bf16.gmra.mrb[0].mxu0 %v1199
  %v1262 = vpop.f32.mrb[0].mxu0
  %v1263 = vadd.f32 0.0, %v1262
  %v1264 = vpop.f32.mrb[0].mxu0
  %v1265 = vpop.f32.mrb[0].mxu0
  %v1266 = vadd.f32 0.0, %v1265
  %v1267 = vpop.f32.mrb[0].mxu0
  %1268 = vdwg.mxu0
  %v1269 = vtanh.pop %v1239
  %v1270 = vtanh.pop %v1242
  %v1271 = vtanh.pop %v1247
  %v1272 = vtanh.pop %v1250
  %v1273 = vxor.u32 %v1255, 2147483648
  %v1274 = vxor.u32 %v1258, 2147483648
  %v1275 = vxor.u32 %v1263, 2147483648
  %v1276 = vxor.u32 %v1266, 2147483648
  %v1277 = vmul.f32 %v1273, 1.442695
  %v1278 = vpow.pop %v1277
  %v1279 = vmul.f32 %v1274, 1.442695
  %v1280 = vpow.pop %v1279
  %v1281 = vmul.f32 %v1275, 1.442695
  %v1282 = vpow.pop %v1281
  %v1283 = vmul.f32 %v1276, 1.442695
  %v1284 = vpow.pop %v1283
  %v1285 = vadd.f32 %v1278, 1.0
  %v1286 = vadd.f32 %v1280, 1.0
  %v1287 = vadd.f32 %v1282, 1.0
  %v1288 = vadd.f32 %v1284, 1.0
  %v1289 = vrcp.pop %v1285
  %v1290 = vmul.f32 1.0, %v1289
  %v1291 = vrcp.pop %v1286
  %v1292 = vmul.f32 1.0, %v1291
  %v1293 = vrcp.pop %v1287
  %v1294 = vmul.f32 1.0, %v1293
  %v1295 = vrcp.pop %v1288
  %v1296 = vmul.f32 1.0, %v1295
  %v1297 = vmul.f32 %v1269, %v1290
  %v1298 = vmul.f32 %v1270, %v1292
  %v1299 = vmul.f32 %v1271, %v1294
  %v1300 = vmul.f32 %v1272, %v1296
  %v1301 = vpack.c.bf16 %v1298, %v1297
  %v1302 = vpack.c.bf16 %v1300, %v1299
  %v1303 = vld [vmem:[%s7 + $0x60] sm:$0xf]
  %v1304 = vld [vmem:[%s7 + $0x64] sm:$0xf]
  %v1305 = vld [vmem:[%s7 + $0x68] sm:$0xf]
  %v1306 = vld [vmem:[%s7 + $0x6c] sm:$0xf]
  %v1307 = vld [vmem:[%s7 + $0x70] sm:$0xf]
  %v1308 = vld [vmem:[%s7 + $0x74] sm:$0xf]
  %v1309 = vld [vmem:[%s7 + $0x78] sm:$0xf]
  %v1310 = vld [vmem:[%s7 + $0x7c] sm:$0xf]
  %v1319 = vunpack.c.l.b16 %v1303
  %v1320 = vunpack.c.l.b16 %v1304
  %v1321 = vunpack.c.l.b16 %v1305
  %v1322 = vunpack.c.l.b16 %v1306
  %v1323 = vunpack.c.l.b16 %v1307
  %v1324 = vunpack.c.l.b16 %v1308
  %v1325 = vunpack.c.l.b16 %v1309
  %v1326 = vunpack.c.l.b16 %v1310
  %v1327 = vpack.c.b16 %v1320, %v1319
  %v1328 = vpack.c.b16 %v1322, %v1321
  %v1329 = vpack.c.b16 %v1324, %v1323
  %v1330 = vpack.c.b16 %v1326, %v1325
  %v1332 = vsel %vm492, %v1327, 0
  %v1335 = vsel %vm492, %v1328, 0
  %v1338 = vsel %vm492, %v1329, 0
  %v1341 = vsel %vm492, %v1330, 0
  %1343 = vmatprep.subr.bf16.mxu0 0
  %1344 = vmatpush1.bf16.msra.mxu0 %v1301
  %1345 = vmatprep.subr.bf16.mxu0 0
  %1346 = vmatpush1.bf16.msra.mxu0 %v1302
  %1347 = vmatprep.subr.bf16.mxu0 0
  %1348 = vmatpush1.bf16.msra.mxu0 %v331
  %1349 = vmatprep.subr.bf16.mxu0 0
  %1350 = vmatpush1.bf16.msra.mxu0 %v332
  %1351 = vmatprep.subr.bf16.mxu0 0
  %1352 = vmatpush1.bf16.msra.mxu0 0
  %1353 = vmatprep.subr.bf16.mxu0 0
  %1354 = vmatpush1.bf16.msra.mxu0 0
  %1355 = vmatprep.subr.bf16.mxu0 0
  %1356 = vmatpush1.bf16.msra.mxu0 0
  %1357 = vmatprep.subr.bf16.mxu0 0
  %1358 = vmatpush1.bf16.msra.mxu0 0
  %1359 = vmatprep.subr.bf16.mxu0 0
  %1360 = vmatpush1.bf16.msra.mxu0 0
  %1361 = vmatprep.subr.bf16.mxu0 0
  %1362 = vmatpush1.bf16.msra.mxu0 0
  %1363 = vmatprep.subr.bf16.mxu0 0
  %1364 = vmatpush1.bf16.msra.mxu0 0
  %1365 = vmatprep.subr.bf16.mxu0 0
  %1366 = vmatpush1.bf16.msra.mxu0 0
  %1367 = vmatprep.subr.bf16.mxu0 0
  %1368 = vmatpush1.bf16.msra.mxu0 0
  %1369 = vmatprep.subr.bf16.mxu0 0
  %1370 = vmatpush1.bf16.msra.mxu0 0
  %1371 = vmatprep.subr.bf16.mxu0 0
  %1372 = vmatpush1.bf16.msra.mxu0 0
  %1373 = vmatprep.subr.bf16.mxu0 0
  %1374 = vmatpush1.bf16.msra.mxu0 0
  %1375 = vmatprep.mubr.bf16.mxu0 0
  %1376 = vmatmul.mubr.bf16.gmra.mrb[0].mxu0 %v1332
  %v1377 = vpop.f32.mrb[0].mxu0
  %v1378 = vpop.f32.mrb[0].mxu0
  %v1379 = vpop.f32.mrb[0].mxu0
  %v1380 = vpop.f32.mrb[0].mxu0
  %1381 = vmatprep.mubr.bf16.mxu0 0
  %1382 = vmatmul.mubr.bf16.gmra.mrb[0].mxu0 %v1335
  %v1383 = vpop.f32.mrb[0].mxu0
  %v1384 = vpop.f32.mrb[0].mxu0
  %v1385 = vpop.f32.mrb[0].mxu0
  %v1386 = vpop.f32.mrb[0].mxu0
  %1387 = vmatprep.mubr.bf16.mxu0 0
  %1388 = vmatmul.mubr.bf16.gmra.mrb[0].mxu0 %v1338
  %v1389 = vpop.f32.mrb[0].mxu0
  %v1390 = vadd.f32 0.0, %v1389
  %v1391 = vpop.f32.mrb[0].mxu0
  %v1392 = vpop.f32.mrb[0].mxu0
  %v1393 = vadd.f32 0.0, %v1392
  %v1394 = vpop.f32.mrb[0].mxu0
  %1395 = vmatprep.mubr.bf16.mxu0 0
  %1396 = vmatmul.mubr.bf16.gmra.mrb[0].mxu0 %v1341
  %v1397 = vpop.f32.mrb[0].mxu0
  %v1398 = vadd.f32 0.0, %v1397
  %v1399 = vpop.f32.mrb[0].mxu0
  %v1400 = vpop.f32.mrb[0].mxu0
  %v1401 = vadd.f32 0.0, %v1400
  %v1402 = vpop.f32.mrb[0].mxu0
  %1403 = vdwg.mxu0
  %v1404 = vadd.f32 %v1138, %v1390
  %v1405 = vadd.f32 %v1139, %v1393
  %v1406 = vadd.f32 %v1140, %v1398
  %v1407 = vadd.f32 %v1141, %v1401
  %v1408 = vmax.f32 %v1404, 0.0
  %v1409 = vmax.f32 %v1405, 0.0
  %v1410 = vmax.f32 %v1406, 0.0
  %v1411 = vmax.f32 %v1407, 0.0
  %v1412 = vpack.c.bf16 %v1409, %v1408
  %v1413 = vpack.c.bf16 %v1411, %v1410
  %v1414 = vld [vmem:[%s8] sm:$0xf]
  %v1415 = vld [vmem:[%s8 + $0x4] sm:$0xf]
  %v1416 = vld [vmem:[%s8 + $0x8] sm:$0xf]
  %v1417 = vld [vmem:[%s8 + $0xc] sm:$0xf]
  %v1422 = vunpack.c.l.b16 %v1414
  %v1423 = vunpack.c.l.b16 %v1415
  %v1424 = vunpack.c.l.b16 %v1416
  %v1425 = vunpack.c.l.b16 %v1417
  %v1426 = vpack.c.b16 %v1423, %v1422
  %v1427 = vpack.c.b16 %v1425, %v1424
  %v1429 = vsel %vm492, %v1426, 0
  %v1432 = vsel %vm492, %v1427, 0
  %1434 = vmatprep.subr.bf16.mxu0 0
  %1435 = vmatpush1.bf16.msra.mxu0 %v1412
  %1436 = vmatprep.subr.bf16.mxu0 0
  %1437 = vmatpush1.bf16.msra.mxu0 %v1413
  %1438 = vmatprep.subr.bf16.mxu0 0
  %1439 = vmatpush1.bf16.msra.mxu0 %v331
  %1440 = vmatprep.subr.bf16.mxu0 0
  %1441 = vmatpush1.bf16.msra.mxu0 %v332
  %1442 = vmatprep.subr.bf16.mxu0 0
  %1443 = vmatpush1.bf16.msra.mxu0 0
  %1444 = vmatprep.subr.bf16.mxu0 0
  %1445 = vmatpush1.bf16.msra.mxu0 0
  %1446 = vmatprep.subr.bf16.mxu0 0
  %1447 = vmatpush1.bf16.msra.mxu0 0
  %1448 = vmatprep.subr.bf16.mxu0 0
  %1449 = vmatpush1.bf16.msra.mxu0 0
  %1450 = vmatprep.subr.bf16.mxu0 0
  %1451 = vmatpush1.bf16.msra.mxu0 0
  %1452 = vmatprep.subr.bf16.mxu0 0
  %1453 = vmatpush1.bf16.msra.mxu0 0
  %1454 = vmatprep.subr.bf16.mxu0 0
  %1455 = vmatpush1.bf16.msra.mxu0 0
  %1456 = vmatprep.subr.bf16.mxu0 0
  %1457 = vmatpush1.bf16.msra.mxu0 0
  %1458 = vmatprep.subr.bf16.mxu0 0
  %1459 = vmatpush1.bf16.msra.mxu0 0
  %1460 = vmatprep.subr.bf16.mxu0 0
  %1461 = vmatpush1.bf16.msra.mxu0 0
  %1462 = vmatprep.subr.bf16.mxu0 0
  %1463 = vmatpush1.bf16.msra.mxu0 0
  %1464 = vmatprep.subr.bf16.mxu0 0
  %1465 = vmatpush1.bf16.msra.mxu0 0
  %1466 = vmatprep.mubr.bf16.mxu0 0
  %1467 = vmatmul.mubr.bf16.gmra.mrb[0].mxu0 %v1429
  %v1468 = vpop.f32.mrb[0].mxu0
  %v1469 = vadd.f32 0.0, %v1468
  %v1470 = vpop.f32.mrb[0].mxu0
  %v1471 = vpop.f32.mrb[0].mxu0
  %v1472 = vadd.f32 0.0, %v1471
  %v1473 = vpop.f32.mrb[0].mxu0
  %1474 = vmatprep.mubr.bf16.mxu0 0
  %1475 = vmatmul.mubr.bf16.gmra.mrb[0].mxu0 %v1432
  %v1476 = vpop.f32.mrb[0].mxu0
  %v1477 = vadd.f32 0.0, %v1476
  %v1478 = vpop.f32.mrb[0].mxu0
  %v1479 = vpop.f32.mrb[0].mxu0
  %v1480 = vadd.f32 0.0, %v1479
  %v1481 = vpop.f32.mrb[0].mxu0
  %1482 = vdwg.mxu0
  %v1483 = vmax.f32 %v1469, 0.0
  %v1484 = vmax.f32 %v1472, 0.0
  %v1485 = vmax.f32 %v1477, 0.0
  %v1486 = vmax.f32 %v1480, 0.0
  %v1487 = vpack.c.bf16 %v1484, %v1483
  %v1488 = vpack.c.bf16 %v1486, %v1485
  %v1489 = vld [vmem:[%s9] sm:$0x1]
  %v1491 = vsel %vm492, %v1489, 0
  %1493 = vmatprep.subr.bf16.mxu0 0
  %1494 = vmatpush1.bf16.msra.mxu0 %v1487
  %1495 = vmatprep.subr.bf16.mxu0 0
  %1496 = vmatpush1.bf16.msra.mxu0 %v1488
  %1497 = vmatprep.subr.bf16.mxu0 0
  %1498 = vmatpush1.bf16.msra.mxu0 %v331
  %1499 = vmatprep.subr.bf16.mxu0 0
  %1500 = vmatpush1.bf16.msra.mxu0 %v332
  %1501 = vmatprep.subr.bf16.mxu0 0
  %1502 = vmatpush1.bf16.msra.mxu0 0
  %1503 = vmatprep.subr.bf16.mxu0 0
  %1504 = vmatpush1.bf16.msra.mxu0 0
  %1505 = vmatprep.subr.bf16.mxu0 0
  %1506 = vmatpush1.bf16.msra.mxu0 0
  %1507 = vmatprep.subr.bf16.mxu0 0
  %1508 = vmatpush1.bf16.msra.mxu0 0
  %1509 = vmatprep.subr.bf16.mxu0 0
  %1510 = vmatpush1.bf16.msra.mxu0 0
  %1511 = vmatprep.subr.bf16.mxu0 0
  %1512 = vmatpush1.bf16.msra.mxu0 0
  %1513 = vmatprep.subr.bf16.mxu0 0
  %1514 = vmatpush1.bf16.msra.mxu0 0
  %1515 = vmatprep.subr.bf16.mxu0 0
  %1516 = vmatpush1.bf16.msra.mxu0 0
  %1517 = vmatprep.subr.bf16.mxu0 0
  %1518 = vmatpush1.bf16.msra.mxu0 0
  %1519 = vmatprep.subr.bf16.mxu0 0
  %1520 = vmatpush1.bf16.msra.mxu0 0
  %1521 = vmatprep.subr.bf16.mxu0 0
  %1522 = vmatpush1.bf16.msra.mxu0 0
  %1523 = vmatprep.subr.bf16.mxu0 0
  %1524 = vmatpush1.bf16.msra.mxu0 0
  %1525 = vmatprep.mubr.bf16.mxu0 0
  %1526 = vmatmul.mubr.bf16.gmra.mrb[0].mxu0 %v1491
  %v1527 = vpop.f32.mrb[0].mxu0
  %v1528 = vadd.f32 0.0, %v1527
  %v1529 = vpop.f32.mrb[0].mxu0
  %v1530 = vpop.f32.mrb[0].mxu0
  %v1531 = vpop.f32.mrb[0].mxu0
  %1532 = vdwg.mxu0
  %1533 = vst [vmem:[%s10] sm:$0x1] %v1528
  // Predicated region
  $region42: #{_lambda_.1} parent=0 // pred_check
    _
  $region43: #{_lambda_.1} parent=0 // pred_check_branch
    %1535 = sbr.rel (0) target = $region45
  $region44: #{_lambda_.1} parent=0 // pred_region
    _
  $region45: #{_lambda_.1} parent=0 // pred_fallthru
    _
  // Predicated region
  $region46: #{_lambda_.1} parent=0 // pred_check
    _
  $region47: #{_lambda_.1} parent=0 // pred_check_branch
    %1537 = sbr.rel (0) target = $region49
  $region48: #{_lambda_.1} parent=0 // pred_region
    _
  $region49: #{_lambda_.1} parent=0 // pred_fallthru
    _

</llo_original>
